<compile_context>
chip_gen: v5e
topology: v5e:2x2
jax: 0.10.0
libtpu: 0.0.40
codegen_flags: <defaults>
</compile_context>

<pallas_src>
import functools

import jax
import jax.numpy as jnp
from jax.experimental import pallas as pl
from jax.experimental.pallas import tpu as pltpu

H1 = 512
H2 = 256
_LANE = 128


def _round_up(x, m):
    return ((x + m - 1) // m) * m


def _vmem_usable_bytes():
    """Per-TensorCore VMEM budget we let Mosaic schedule into (7/8 of physical,
    clamped to known generations).  Falls back to the v7x 64 MiB floor."""
    cap = 64 << 20
    try:
        cap = int(pltpu.get_tpu_info().vmem_capacity_bytes)
    except Exception:
        pass
    cap = max(min(cap, 128 << 20), 64 << 20)
    return (cap * 7) // 8


def _default_nsplit():
    """The 2-way parallel K split only pays off on v7x's two TensorCores."""
    try:
        kind = jax.devices()[0].device_kind.lower()
    except Exception:
        return 1
    return 2 if "7" in kind else 1


def _auto_tk(itemsize, *, max_batch=128):
    """Largest K tile whose double-buffered W1 + x stream fits the VMEM budget."""
    usable = _vmem_usable_bytes()
    budget = max(usable - (6 << 20), 8 << 20)  # reserve acc/params/out/misc
    tk = budget // (2 * itemsize * (H1 + max_batch))
    return int(min(max((tk // _LANE) * _LANE, 512), 32768))


def _tiling(D, nsplit, tk_max):
    """Split D into nsplit * n_k tiles of tk_eff (mult. of 128), minimal pad."""
    per_split = pl.cdiv(D, nsplit)
    n_k = pl.cdiv(per_split, tk_max)
    tk_eff = _round_up(pl.cdiv(per_split, n_k), _LANE)
    Dp = nsplit * n_k * tk_eff
    return tk_eff, n_k, Dp


# ---------------------------------------------------------------------------
# Fused single pass (nsplit == 1, best for single-TC v5e/v6e): layer-1 matmul
# accumulated into resident VMEM scratch; on the last K step run the
# bias + LeakyReLU(0.2) + layer-2 + LeakyReLU(0.2) + layer-3 epilogue.
# Layer 3 is a VPU reduction against a (1, 256) row; output stored lane-dense
# as (Bp, 128) and sliced to (B, 1) by the wrapper.
# ---------------------------------------------------------------------------
def _fused_kernel(x_ref, w1_ref, b1_ref, w2_ref, b2_ref, w3_ref, b3_ref,
                  out_ref, acc_ref):
    k = pl.program_id(0)

    @pl.when(k == 0)
    def _():
        acc_ref[...] = jnp.zeros_like(acc_ref)

    acc_ref[...] += jnp.dot(x_ref[...], w1_ref[...],
                            preferred_element_type=jnp.float32)

    @pl.when(k == pl.num_programs(0) - 1)
    def _():
        h1 = acc_ref[...] + b1_ref[...]
        h1 = jnp.where(h1 > 0, h1, 0.2 * h1)                       # LeakyReLU
        h2 = jnp.dot(h1, w2_ref[...],
                     preferred_element_type=jnp.float32) + b2_ref[...]
        h2 = jnp.where(h2 > 0, h2, 0.2 * h2)                       # LeakyReLU
        val = jnp.sum(h2 * w3_ref[...], axis=-1, keepdims=True) + b3_ref[...]
        out_ref[...] = jnp.broadcast_to(val, out_ref.shape).astype(out_ref.dtype)


# ---------------------------------------------------------------------------
# Two-pass path (nsplit >= 2, for v7x megacore): pass 1 produces `nsplit`
# independent partial sums (leading "parallel" grid axis -> one per TC).
# ---------------------------------------------------------------------------
def _layer1_kernel(x_ref, w1_ref, part_ref):
    k = pl.program_id(1)

    @pl.when(k == 0)
    def _():
        part_ref[...] = jnp.zeros_like(part_ref)

    part_ref[...] += jnp.dot(x_ref[...], w1_ref[...],
                             preferred_element_type=jnp.float32)


def _epilogue_kernel(part_ref, b1_ref, w2_ref, b2_ref, w3_ref, b3_ref, out_ref):
    h1 = jnp.sum(part_ref[...], axis=0) + b1_ref[...]               # (Bp, 512)
    h1 = jnp.where(h1 > 0, h1, 0.2 * h1)
    h2 = jnp.dot(h1, w2_ref[...], preferred_element_type=jnp.float32) + b2_ref[...]
    h2 = jnp.where(h2 > 0, h2, 0.2 * h2)
    val = jnp.sum(h2 * w3_ref[...], axis=-1, keepdims=True) + b3_ref[...]
    out_ref[...] = jnp.broadcast_to(val, out_ref.shape).astype(out_ref.dtype)


def prepare_params(params, *, tk=None, nsplit=None, compute_dtype=jnp.float32):
    """One-time preprocessing (do NOT call per forward).

    * W1 (the ~400 MB HBM stream) is cast to `compute_dtype` and padded ONCE so
      its K axis splits into nsplit * n_k clean tiles of tk_eff.
    * Layer-2/3 params cast to f32; w3 stored as a (1, 256) row, b3 as (1, 1).
    """
    w1, b1, w2, b2, w3, b3 = params
    D = w1.shape[0]
    itemsize = jnp.dtype(compute_dtype).itemsize
    if nsplit is None:
        nsplit = _default_nsplit()
    if tk is None:
        tk = _auto_tk(itemsize)
    _, _, Dp = _tiling(D, nsplit, tk)
    w1p = jnp.pad(w1, ((0, Dp - D), (0, 0))).astype(compute_dtype)
    prep = (w1p,
            b1.reshape(1, H1).astype(jnp.float32),
            w2.astype(jnp.float32),
            b2.reshape(1, H2).astype(jnp.float32),
            w3.reshape(1, H2).astype(jnp.float32),
            b3.reshape(1, 1).astype(jnp.float32))
    cfg = dict(tk=int(tk), nsplit=int(nsplit), compute_dtype=compute_dtype)
    return prep, cfg


@functools.partial(jax.jit, static_argnames=("tk", "nsplit", "compute_dtype"))
def discriminator_forward(img, prep, *, tk, nsplit, compute_dtype=jnp.float32):
    """img: (B, C, H, W).  `prep`/kwargs from prepare_params().  Returns (B, 1) f32."""
    w1p, b1, w2, b2, w3row, b3 = prep
    B = img.shape[0]
    x = img.reshape(B, -1).astype(compute_dtype)        # == img.view(B, -1)
    D = x.shape[1]
    Dp_w, h1 = w1p.shape
    assert h1 == H1

    tk_eff, n_k, Dp = _tiling(D, nsplit, tk)
    assert Dp == Dp_w, (Dp, Dp_w)

    itemsize = jnp.dtype(compute_dtype).itemsize
    sublane = 16 if itemsize == 2 else 8
    Bp = _round_up(max(B, sublane), sublane)
    # x is tiny next to the W1 stream; this per-call pad is cheap at these
    # batch sizes.
    # TODO(synk): at training batches (B >= 64) pre-pad D in the input pipeline
    # to skip this extra HBM round trip of x.
    x = jnp.pad(x, ((0, Bp - B), (0, Dp - D)))

    usable = _vmem_usable_bytes()
    stream_bytes = 2 * (tk_eff * H1 + Bp * tk_eff) * itemsize  # dbl-buf W1 + x

    if nsplit == 1:
        need = (stream_bytes + Bp * H1 * 4 + 2 * Bp * _LANE * 4
                + 2 * (H1 + H1 * H2 + 2 * H2 + 1) * 4)
        vmem_limit = int(max(min(need + (4 << 20), usable), 16 << 20))
        out128 = pl.pallas_call(
            _fused_kernel,
            out_shape=jax.ShapeDtypeStruct((Bp, _LANE), jnp.float32),
            grid_spec=pltpu.PrefetchScalarGridSpec(
                num_scalar_prefetch=0,
                grid=(n_k,),
                in_specs=[
                    pl.BlockSpec((Bp, tk_eff), lambda k: (0, k)),
                    pl.BlockSpec((tk_eff, H1), lambda k: (k, 0)),
                    pl.BlockSpec((1, H1), lambda k: (0, 0)),       # b1 (resident)
                    pl.BlockSpec((H1, H2), lambda k: (0, 0)),      # w2 (resident)
                    pl.BlockSpec((1, H2), lambda k: (0, 0)),       # b2
                    pl.BlockSpec((1, H2), lambda k: (0, 0)),       # w3 row
                    pl.BlockSpec((1, 1), lambda k: (0, 0)),        # b3
                ],
                out_specs=pl.BlockSpec((Bp, _LANE), lambda k: (0, 0)),
                scratch_shapes=[pltpu.VMEM((Bp, H1), jnp.float32)],
            ),
            compiler_params=pltpu.CompilerParams(
                dimension_semantics=("arbitrary",),
                vmem_limit_bytes=vmem_limit,
            ),
        )(x, w1p, b1, w2, b2, w3row, b3)
    else:
        need = stream_bytes + 2 * Bp * H1 * 4
        vmem_limit = int(max(min(need + (4 << 20), usable), 16 << 20))
        partials = pl.pallas_call(
            _layer1_kernel,
            out_shape=jax.ShapeDtypeStruct((nsplit, Bp, H1), jnp.float32),
            grid_spec=pltpu.PrefetchScalarGridSpec(
                num_scalar_prefetch=0,
                grid=(nsplit, n_k),
                in_specs=[
                    pl.BlockSpec((Bp, tk_eff), lambda p, k: (0, p * n_k + k)),
                    pl.BlockSpec((tk_eff, H1), lambda p, k: (p * n_k + k, 0)),
                ],
                out_specs=pl.BlockSpec((None, Bp, H1), lambda p, k: (p, 0, 0)),
            ),
            compiler_params=pltpu.CompilerParams(
                dimension_semantics=("parallel", "arbitrary"),
                vmem_limit_bytes=vmem_limit,
            ),
        )(x, w1p)

        out128 = pl.pallas_call(
            _epilogue_kernel,
            out_shape=jax.ShapeDtypeStruct((Bp, _LANE), jnp.float32),
            in_specs=[pl.BlockSpec(memory_space=pltpu.MemorySpace.VMEM)] * 6,
            out_specs=pl.BlockSpec(memory_space=pltpu.MemorySpace.VMEM),
        )(partials, b1, w2, b2, w3row, b3)

    return out128[:B, :1]


def init_params(key, in_dim, h1=H1, h2=H2, out_dim=1):
    """Deterministic init mimicking torch.nn.Linear (uniform +/- 1/sqrt(fan_in)).
    Weights stored as (in_features, out_features)."""
    ks = jax.random.split(key, 6)

    def lin(kw, kb, fan_in, fan_out):
        bound = 1.0 / jnp.sqrt(fan_in)
        w = jax.random.uniform(kw, (fan_in, fan_out), jnp.float32, -bound, bound)
        b = jax.random.uniform(kb, (1, fan_out), jnp.float32, -bound, bound)
        return w, b

    w1, b1 = lin(ks[0], ks[1], in_dim, h1)
    w2, b2 = lin(ks[2], ks[3], h1, h2)
    w3, b3 = lin(ks[4], ks[5], h2, out_dim)
    return (w1, b1, w2, b2, w3, b3)


def reference_forward(img, params, compute_dtype=jnp.float32):
    w1, b1, w2, b2, w3, b3 = params
    x = img.reshape(img.shape[0], -1)
    h = jnp.dot(x.astype(compute_dtype), w1.astype(compute_dtype),
                preferred_element_type=jnp.float32) + b1
    h = jnp.where(h > 0, h, 0.2 * h)
    h = h @ w2 + b2
    h = jnp.where(h > 0, h, 0.2 * h)
    return h @ w3 + b3


if __name__ == "__main__":
    # Small shapes consistent with the module's forward (NCHW image -> flatten).
    # Full module uses (B, 3, 255, 255) -> D = 195075; here (2, 3, 16, 16) -> 768.
    B, C, H, W = 2, 3, 16, 16
    in_dim = C * H * W

    key = jax.random.PRNGKey(0)
    k_img, k_par = jax.random.split(key)
    img = jax.random.normal(k_img, (B, C, H, W), jnp.float32)
    params = init_params(k_par, in_dim)
    ref = reference_forward(img, params)

    # 1) Default config: exact f32 path, generation-aware tile / split choice.
    prep, cfg = prepare_params(params)
    out = jax.block_until_ready(discriminator_forward(img, prep, **cfg))
    assert out.shape == (B, 1), out.shape
    assert jnp.allclose(out, ref, atol=1e-4, rtol=1e-4), (out, ref)

    # 2) Explicit 2-way parallel K split (the v7x two-TensorCore path).
    prep2, cfg2 = prepare_params(params, nsplit=2)
    out2 = jax.block_until_ready(discriminator_forward(img, prep2, **cfg2))
    assert out2.shape == (B, 1), out2.shape
    assert jnp.allclose(out2, ref, atol=1e-4, rtol=1e-4), (out2, ref)

    # 3) Fused single pass with a bf16 W1 stream (halves the dominant HBM
    #    traffic; f32 accumulation + f32 epilogue preserved).  Opt-in: numerics
    #    deviate from the PyTorch f32 module at bf16 level.
    prep16, cfg16 = prepare_params(params, nsplit=1, compute_dtype=jnp.bfloat16)
    out16 = jax.block_until_ready(discriminator_forward(img, prep16, **cfg16))
    ref16 = reference_forward(img, params, compute_dtype=jnp.bfloat16)
    assert out16.shape == (B, 1), out16.shape
    assert jnp.allclose(out16, ref16, atol=1e-2, rtol=1e-2), (out16, ref16)

    print("KERNEL_OK")
</pallas_src>

<mosaic_0001>
module attributes {stable_mosaic.version = 11 : i64} {
  func.func @_fused_kernel(%arg0: i32, %arg1: memref<8x768xf32, #tpu.memory_space<vmem>>, %arg2: memref<768x512xf32, #tpu.memory_space<vmem>>, %arg3: memref<1x512xf32, #tpu.memory_space<vmem>>, %arg4: memref<512x256xf32, #tpu.memory_space<vmem>>, %arg5: memref<1x256xf32, #tpu.memory_space<vmem>>, %arg6: memref<1x256xf32, #tpu.memory_space<vmem>>, %arg7: memref<1x1xf32, #tpu.memory_space<vmem>>, %arg8: memref<8x128xf32, #tpu.memory_space<vmem>>, %arg9: memref<8x512xf32, #tpu.memory_space<vmem>>) attributes {dimension_semantics = [#tpu.dimension_semantics<arbitrary>], iteration_bounds = array<i64: 1>, scalar_prefetch = 0 : i64, scratch_operands = 1 : i64, tpu.core_type = #tpu.core_type<tc>, window_params = [{transform_indices = @transform_0, window_bounds = array<i64: 8, 768>}, {transform_indices = @transform_1, window_bounds = array<i64: 768, 512>}, {pipeline_mode = #tpu.pipeline_mode<synchronous>, transform_indices = @transform_2, window_bounds = array<i64: 1, 512>}, {pipeline_mode = #tpu.pipeline_mode<synchronous>, transform_indices = @transform_3, window_bounds = array<i64: 512, 256>}, {pipeline_mode = #tpu.pipeline_mode<synchronous>, transform_indices = @transform_4, window_bounds = array<i64: 1, 256>}, {pipeline_mode = #tpu.pipeline_mode<synchronous>, transform_indices = @transform_5, window_bounds = array<i64: 1, 256>}, {pipeline_mode = #tpu.pipeline_mode<synchronous>, transform_indices = @transform_6, window_bounds = array<i64: 1, 1>}, {pipeline_mode = #tpu.pipeline_mode<synchronous>, transform_indices = @transform_7, window_bounds = array<i64: 8, 128>}]} {
    %c0_i32 = arith.constant 0 : i32
    %0 = arith.cmpi eq, %arg0, %c0_i32 : i32
    %1 = arith.extui %0 : i1 to i32
    %c0_i32_0 = arith.constant 0 : i32
    %2 = arith.cmpi ne, %1, %c0_i32_0 : i32
    scf.if %2 {
      %cst_10 = arith.constant 0.000000e+00 : f32
      %12 = vector.broadcast %cst_10 : f32 to vector<8x512xf32>
      %c0_11 = arith.constant 0 : index
      %c0_12 = arith.constant 0 : index
      %13 = vector.load %arg9[%c0_11, %c0_12] : memref<8x512xf32, #tpu.memory_space<vmem>>, vector<8x512xf32>
      tpu.vector_store %arg9[%c0_11, %c0_12], %12 {strides = array<i32>} : memref<8x512xf32, #tpu.memory_space<vmem>>, vector<8x512xf32>,
    } else {
    }
    %c0 = arith.constant 0 : index
    %c0_1 = arith.constant 0 : index
    %3 = vector.load %arg9[%c0, %c0_1] : memref<8x512xf32, #tpu.memory_space<vmem>>, vector<8x512xf32>
    %c0_2 = arith.constant 0 : index
    %c0_3 = arith.constant 0 : index
    %4 = vector.load %arg1[%c0_2, %c0_3] : memref<8x768xf32, #tpu.memory_space<vmem>>, vector<8x768xf32>
    %c0_4 = arith.constant 0 : index
    %c0_5 = arith.constant 0 : index
    %5 = vector.load %arg2[%c0_4, %c0_5] : memref<768x512xf32, #tpu.memory_space<vmem>>, vector<768x512xf32>
    %cst = arith.constant dense<0.000000e+00> : vector<8x512xf32>
    %6 = tpu.matmul %4, %5, %cst {dimension_numbers = #tpu.dot_dimension_numbers<[1], [0], [0], [1], [0, 0, 1, 1], [], []>} : vector<8x768xf32>, vector<768x512xf32>, vector<8x512xf32> -> vector<8x512xf32>
    %7 = arith.addf %3, %6 : vector<8x512xf32>
    %c0_6 = arith.constant 0 : index
    %c0_7 = arith.constant 0 : index
    %8 = vector.load %arg9[%c0_6, %c0_7] : memref<8x512xf32, #tpu.memory_space<vmem>>, vector<8x512xf32>
    tpu.vector_store %arg9[%c0_6, %c0_7], %7 {strides = array<i32>} : memref<8x512xf32, #tpu.memory_space<vmem>>, vector<8x512xf32>,
    %c0_i32_8 = arith.constant 0 : i32
    %9 = arith.cmpi eq, %arg0, %c0_i32_8 : i32
    %10 = arith.extui %9 : i1 to i32
    %c0_i32_9 = arith.constant 0 : i32
    %11 = arith.cmpi ne, %10, %c0_i32_9 : i32
    scf.if %11 {
      %c0_10 = arith.constant 0 : index
      %c0_11 = arith.constant 0 : index
      %12 = vector.load %arg9[%c0_10, %c0_11] : memref<8x512xf32, #tpu.memory_space<vmem>>, vector<8x512xf32>
      %c0_12 = arith.constant 0 : index
      %c0_13 = arith.constant 0 : index
      %13 = vector.load %arg3[%c0_12, %c0_13] : memref<1x512xf32, #tpu.memory_space<vmem>>, vector<1x512xf32>
      %14 = vector.broadcast %13 : vector<1x512xf32> to vector<8x512xf32>
      %15 = arith.addf %12, %14 : vector<8x512xf32>
      %cst_14 = arith.constant 0.000000e+00 : f32
      %16 = vector.broadcast %cst_14 : f32 to vector<8x512xf32>
      %17 = arith.cmpf ogt, %15, %16 : vector<8x512xf32>
      %cst_15 = arith.constant 2.000000e-01 : f32
      %18 = vector.broadcast %cst_15 : f32 to vector<8x512xf32>
      %19 = arith.mulf %18, %15 : vector<8x512xf32>
      %20 = arith.select %17, %15, %19 : vector<8x512xi1>, vector<8x512xf32>
      %c0_16 = arith.constant 0 : index
      %c0_17 = arith.constant 0 : index
      %21 = vector.load %arg4[%c0_16, %c0_17] : memref<512x256xf32, #tpu.memory_space<vmem>>, vector<512x256xf32>
      %cst_18 = arith.constant dense<0.000000e+00> : vector<8x256xf32>
      %22 = tpu.matmul %20, %21, %cst_18 {dimension_numbers = #tpu.dot_dimension_numbers<[1], [0], [0], [1], [0, 0, 1, 1], [], []>} : vector<8x512xf32>, vector<512x256xf32>, vector<8x256xf32> -> vector<8x256xf32>
      %c0_19 = arith.constant 0 : index
      %c0_20 = arith.constant 0 : index
      %23 = vector.load %arg5[%c0_19, %c0_20] : memref<1x256xf32, #tpu.memory_space<vmem>>, vector<1x256xf32>
      %24 = vector.broadcast %23 : vector<1x256xf32> to vector<8x256xf32>
      %25 = arith.addf %22, %24 : vector<8x256xf32>
      %cst_21 = arith.constant 0.000000e+00 : f32
      %26 = vector.broadcast %cst_21 : f32 to vector<8x256xf32>
      %27 = arith.cmpf ogt, %25, %26 : vector<8x256xf32>
      %cst_22 = arith.constant 2.000000e-01 : f32
      %28 = vector.broadcast %cst_22 : f32 to vector<8x256xf32>
      %29 = arith.mulf %28, %25 : vector<8x256xf32>
      %30 = arith.select %27, %25, %29 : vector<8x256xi1>, vector<8x256xf32>
      %c0_23 = arith.constant 0 : index
      %c0_24 = arith.constant 0 : index
      %31 = vector.load %arg6[%c0_23, %c0_24] : memref<1x256xf32, #tpu.memory_space<vmem>>, vector<1x256xf32>
      %32 = vector.broadcast %31 : vector<1x256xf32> to vector<8x256xf32>
      %33 = arith.mulf %30, %32 : vector<8x256xf32>
      %cst_25 = arith.constant dense<0.000000e+00> : vector<8xf32>
      %34 = vector.multi_reduction <add>, %33, %cst_25 [1] : vector<8x256xf32> to vector<8xf32>
      %35 = vector.shape_cast %34 : vector<8xf32> to vector<8x1xf32>
      %c0_26 = arith.constant 0 : index
      %c0_27 = arith.constant 0 : index
      %36 = vector.load %arg7[%c0_26, %c0_27] : memref<1x1xf32, #tpu.memory_space<vmem>>, vector<1x1xf32>
      %37 = vector.broadcast %36 : vector<1x1xf32> to vector<8x1xf32>
      %38 = arith.addf %35, %37 : vector<8x1xf32>
      %39 = vector.shape_cast %38 : vector<8x1xf32> to vector<8x1xf32>
      %40 = vector.broadcast %39 : vector<8x1xf32> to vector<8x128xf32>
      %c0_28 = arith.constant 0 : index
      %c0_29 = arith.constant 0 : index
      %41 = vector.load %arg8[%c0_28, %c0_29] : memref<8x128xf32, #tpu.memory_space<vmem>>, vector<8x128xf32>
      tpu.vector_store %arg8[%c0_28, %c0_29], %40 {strides = array<i32>} : memref<8x128xf32, #tpu.memory_space<vmem>>, vector<8x128xf32>,
    } else {
    }
    return
  }
  func.func @transform_0(%arg0: i32) -> (i32, i32) {
    %c0_i32 = arith.constant 0 : i32
    %c0_i32_0 = arith.constant 0 : i32
    return %c0_i32, %arg0 : i32, i32
  }
  func.func @transform_1(%arg0: i32) -> (i32, i32) {
    %c0_i32 = arith.constant 0 : i32
    %c0_i32_0 = arith.constant 0 : i32
    return %arg0, %c0_i32 : i32, i32
  }
  func.func @transform_2(%arg0: i32) -> (i32, i32) {
    %c0_i32 = arith.constant 0 : i32
    %c0_i32_0 = arith.constant 0 : i32
    %c0_i32_1 = arith.constant 0 : i32
    return %c0_i32, %c0_i32_0 : i32, i32
  }
  func.func @transform_3(%arg0: i32) -> (i32, i32) {
    %c0_i32 = arith.constant 0 : i32
    %c0_i32_0 = arith.constant 0 : i32
    %c0_i32_1 = arith.constant 0 : i32
    return %c0_i32, %c0_i32_0 : i32, i32
  }
  func.func @transform_4(%arg0: i32) -> (i32, i32) {
    %c0_i32 = arith.constant 0 : i32
    %c0_i32_0 = arith.constant 0 : i32
    %c0_i32_1 = arith.constant 0 : i32
    return %c0_i32, %c0_i32_0 : i32, i32
  }
  func.func @transform_5(%arg0: i32) -> (i32, i32) {
    %c0_i32 = arith.constant 0 : i32
    %c0_i32_0 = arith.constant 0 : i32
    %c0_i32_1 = arith.constant 0 : i32
    return %c0_i32, %c0_i32_0 : i32, i32
  }
  func.func @transform_6(%arg0: i32) -> (i32, i32) {
    %c0_i32 = arith.constant 0 : i32
    %c0_i32_0 = arith.constant 0 : i32
    %c0_i32_1 = arith.constant 0 : i32
    return %c0_i32, %c0_i32_0 : i32, i32
  }
  func.func @transform_7(%arg0: i32) -> (i32, i32) {
    %c0_i32 = arith.constant 0 : i32
    %c0_i32_0 = arith.constant 0 : i32
    %c0_i32_1 = arith.constant 0 : i32
    return %c0_i32, %c0_i32_0 : i32, i32
  }
}

</mosaic_0001>

<llo_original>
// kernel: discriminator_forward.1
$region0: #{discriminator_forward.1}
  #allocation0 [shape = 'u32[]', space=smem, size = 0x4, offset = 0x4, fixed_abs, tag = 'smem constant byte address 0x4 - core index']
  #allocation1 [shape = 'u32[72,128]{1,0:T(1,128)}', space=vmem, size = 0x9000, scoped, tag = 'internal scratch']
  #allocation2 [shape = 'f32[8,512]{1,0:T(8,128)}', space=vmem, size = 0x4000, scoped, tag = 'scratch operand']
  #allocation3 [shape = 'f32[1,1]{1,0:T(1,128)S(1)}', space=vmem, size = 0x200, scoped, tag = 'scoped memory for discriminator_forward.1']
  %s0 = inlined_call_operand.vmem [shape: f32[8,768], index: 0, kind: input, shape index: {}]
  %s1 = inlined_call_operand.hbm [shape: f32[768,512], index: 1, kind: input, shape index: {}]
  %s2 = inlined_call_operand.hbm [shape: f32[1,512], index: 2, kind: input, shape index: {}]
  %s3 = inlined_call_operand.hbm [shape: f32[512,256], index: 3, kind: input, shape index: {}]
  %s4 = inlined_call_operand.hbm [shape: f32[1,256], index: 4, kind: input, shape index: {}]
  %s5 = inlined_call_operand.hbm [shape: f32[1,256], index: 5, kind: input, shape index: {}]
  %s6 = inlined_call_operand.<no memory space> [shape: f32[1,1], index: 6, kind: input, shape index: {}]
  %s7 = inlined_call_operand.vmem [shape: f32[8,128], index: 7, kind: output, shape index: {}]
  %s8 = sld [smem:[#allocation0]]
  $region66: #{discriminator_forward.1} parent=0
    _
  %s10 = ssub.s32 1, %s8
  %s11 = scalar_select 0, %s10, %s8
  %v12 = vstv %s6
  %13 = vst [vmem:[#allocation3] sm:$0x1] %v12
  $region1: #{discriminator_forward.1} parent=0
    #allocation4 [shape = 'u8[1572864]{0}', space=vmem, size = 0x180000, scoped, tag = 'input window, operand 1, single buffered']
    #allocation5 [shape = 's32[1]{0}', space=sflag, size = 0x4, scoped, tag = 'scoped memory for discriminator_forward.1']
    #allocation6 [shape = 'u8[2048]{0}', space=vmem, size = 0x800, scoped, tag = 'input window, operand 2, single buffered']
    #allocation7 [shape = 's32[1]{0}', space=sflag, size = 0x4, scoped, tag = 'scoped memory for discriminator_forward.1']
    #allocation8 [shape = 'u8[524288]{0}', space=vmem, size = 0x80000, scoped, tag = 'input window, operand 3, single buffered']
    #allocation9 [shape = 'u8[1024]{0}', space=vmem, size = 0x400, scoped, tag = 'input window, operand 4, single buffered']
    #allocation10 [shape = 's32[1]{0}', space=sflag, size = 0x4, scoped, tag = 'scoped memory for discriminator_forward.1']
    #allocation11 [shape = 'u8[1024]{0}', space=vmem, size = 0x400, scoped, tag = 'input window, operand 5, single buffered']
    %14 = vsyncpa [#allocation5], 0
    %15 = vsyncpa [#allocation7], 0
    %16 = vsyncpa [#allocation10], 0
    // Predicated region
    $region2: #{discriminator_forward.1} parent=1 // pred_check
      _
    $region3: #{discriminator_forward.1} parent=1 // pred_check_branch
      %18 = sbr.rel (0) target = $region5
    $region4: #{discriminator_forward.1} parent=1 // pred_region
      _
    $region5: #{discriminator_forward.1} parent=1 // pred_fallthru
      _
    // Predicated region
    $region6: #{discriminator_forward.1} parent=1 // pred_check
      _
    $region7: #{discriminator_forward.1} parent=1 // pred_check_branch
      %20 = sbr.rel (0) target = $region9
    $region8: #{discriminator_forward.1} parent=1 // pred_region
      %22 = vsyncadd [#allocation5], 0
      %s23 = sshll.u32 %s1, 4
      %s24 = int_to_ptr.hbm [resolvable:$true] %s23
      %s25 = sshll.u32 [#allocation4], 4
      %s26 = int_to_ptr.vmem [resolvable:$true] %s25
      %31 = dma.hbm_to_vmem [thread:$0]  %s24, 49152, %s26, [#allocation5], 512, 512, 32
    $region9: #{discriminator_forward.1} parent=1 // pred_fallthru
      _
    // Predicated region
    $region10: #{discriminator_forward.1} parent=1 // pred_check
      _
    $region11: #{discriminator_forward.1} parent=1 // pred_check_branch
      %33 = sbr.rel (0) target = $region13
    $region12: #{discriminator_forward.1} parent=1 // pred_region
      %35 = vsyncadd [#allocation7], 0
      %s37 = sshll.u32 %s2, 4
      %s38 = int_to_ptr.hbm [resolvable:$true] %s37
      %s39 = sshll.u32 [#allocation6], 4
      %s40 = int_to_ptr.vmem [resolvable:$true] %s39
      %42 = dma.hbm_to_vmem [thread:$0]  %s38, 64, %s40, [#allocation7]
    $region13: #{discriminator_forward.1} parent=1 // pred_fallthru
      _
    // Predicated region
    $region14: #{discriminator_forward.1} parent=1 // pred_check
      _
    $region15: #{discriminator_forward.1} parent=1 // pred_check_branch
      %44 = sbr.rel (0) target = $region17
    $region16: #{discriminator_forward.1} parent=1 // pred_region
      %46 = vsyncadd [#allocation7], 0
      %s47 = sshll.u32 %s3, 4
      %s48 = int_to_ptr.hbm [resolvable:$true] %s47
      %s49 = sshll.u32 [#allocation8], 4
      %s50 = int_to_ptr.vmem [resolvable:$true] %s49
      %55 = dma.hbm_to_vmem [thread:$0]  %s48, 16384, %s50, [#allocation7], 256, 256, 16
    $region17: #{discriminator_forward.1} parent=1 // pred_fallthru
      _
    // Predicated region
    $region18: #{discriminator_forward.1} parent=1 // pred_check
      _
    $region19: #{discriminator_forward.1} parent=1 // pred_check_branch
      %57 = sbr.rel (0) target = $region21
    $region20: #{discriminator_forward.1} parent=1 // pred_region
      %59 = vsyncadd [#allocation10], 0
      %s61 = sshll.u32 %s4, 4
      %s62 = int_to_ptr.hbm [resolvable:$true] %s61
      %s63 = sshll.u32 [#allocation9], 4
      %s64 = int_to_ptr.vmem [resolvable:$true] %s63
      %66 = dma.hbm_to_vmem [thread:$0]  %s62, 32, %s64, [#allocation10]
    $region21: #{discriminator_forward.1} parent=1 // pred_fallthru
      _
    // Predicated region
    $region22: #{discriminator_forward.1} parent=1 // pred_check
      _
    $region23: #{discriminator_forward.1} parent=1 // pred_check_branch
      %68 = sbr.rel (0) target = $region25
    $region24: #{discriminator_forward.1} parent=1 // pred_region
      %70 = vsyncadd [#allocation10], 0
      %s72 = sshll.u32 %s5, 4
      %s73 = int_to_ptr.hbm [resolvable:$true] %s72
      %s74 = sshll.u32 [#allocation11], 4
      %s75 = int_to_ptr.vmem [resolvable:$true] %s74
      %77 = dma.hbm_to_vmem [thread:$0]  %s73, 32, %s75, [#allocation10]
    $region25: #{discriminator_forward.1} parent=1 // pred_fallthru
      _
    // Predicated region
    $region26: #{discriminator_forward.1} parent=1 // pred_check
      _
    $region27: #{discriminator_forward.1} parent=1 // pred_check_branch
      %79 = sbr.rel (0) target = $region29
    $region28: #{discriminator_forward.1} parent=1 // pred_region
      _
    $region29: #{discriminator_forward.1} parent=1 // pred_fallthru
      _
    // Predicated region
    $region30: #{discriminator_forward.1} parent=1 // pred_check
      _
    $region31: #{discriminator_forward.1} parent=1 // pred_check_branch
      %81 = sbr.rel (0) target = $region33
    $region32: #{discriminator_forward.1} parent=1 // pred_region
      %83 = dma.done [#allocation5], 49152
    $region33: #{discriminator_forward.1} parent=1 // pred_fallthru
      _
    // Predicated region
    $region34: #{discriminator_forward.1} parent=1 // pred_check
      _
    $region35: #{discriminator_forward.1} parent=1 // pred_check_branch
      %85 = sbr.rel (0) target = $region37
    $region36: #{discriminator_forward.1} parent=1 // pred_region
      %87 = dma.done [#allocation7], 64
    $region37: #{discriminator_forward.1} parent=1 // pred_fallthru
      _
    // Predicated region
    $region38: #{discriminator_forward.1} parent=1 // pred_check
      _
    $region39: #{discriminator_forward.1} parent=1 // pred_check_branch
      %89 = sbr.rel (0) target = $region41
    $region40: #{discriminator_forward.1} parent=1 // pred_region
      %91 = dma.done [#allocation7], 16384
    $region41: #{discriminator_forward.1} parent=1 // pred_fallthru
      _
    // Predicated region
    $region42: #{discriminator_forward.1} parent=1 // pred_check
      _
    $region43: #{discriminator_forward.1} parent=1 // pred_check_branch
      %93 = sbr.rel (0) target = $region45
    $region44: #{discriminator_forward.1} parent=1 // pred_region
      %95 = dma.done [#allocation10], 32
    $region45: #{discriminator_forward.1} parent=1 // pred_fallthru
      _
    // Predicated region
    $region46: #{discriminator_forward.1} parent=1 // pred_check
      _
    $region47: #{discriminator_forward.1} parent=1 // pred_check_branch
      %97 = sbr.rel (0) target = $region49
    $region48: #{discriminator_forward.1} parent=1 // pred_region
      %99 = dma.done [#allocation10], 32
    $region49: #{discriminator_forward.1} parent=1 // pred_fallthru
      _
    %p100 = scmp.eq.s32.totalorder 0, 0
    // Predicated region
    $region50: #{discriminator_forward.1} parent=1 // pred_check
      %p101 = pneg %p100
    $region51: #{discriminator_forward.1} parent=1 // pred_check_branch
      %103 = sbr.rel (%p101) target = $region53
    $region52: #{discriminator_forward.1} parent=1 // pred_region
      %104 = vst [vmem:[#allocation2] sm:$0xff] 0.0
      %105 = vst [vmem:[#allocation2 + $0x8] sm:$0xff] 0.0
      %106 = vst [vmem:[#allocation2 + $0x10] sm:$0xff] 0.0
      %107 = vst [vmem:[#allocation2 + $0x18] sm:$0xff] 0.0
    $region53: #{discriminator_forward.1} parent=1 // pred_fallthru
      _
    %v108 = vld [vmem:[#allocation2] sm:$0xff]
    %v109 = vld [vmem:[#allocation2 + $0x8] sm:$0xff]
    %v110 = vld [vmem:[#allocation2 + $0x10] sm:$0xff]
    %v111 = vld [vmem:[#allocation2 + $0x18] sm:$0xff]
    %v112 = vld [vmem:[%s0] sm:$0xff]
    %v113 = vld [vmem:[%s0 + $0x8] sm:$0xff]
    %v114 = vld [vmem:[%s0 + $0x10] sm:$0xff]
    %v115 = vld [vmem:[%s0 + $0x18] sm:$0xff]
    %v116 = vld [vmem:[%s0 + $0x20] sm:$0xff]
    %v117 = vld [vmem:[%s0 + $0x28] sm:$0xff]
    %v118 = vld [vmem:[#allocation4] sm:$0xff]
    %v119 = vld [vmem:[#allocation4 + $0x8] sm:$0xff]
    %v120 = vld [vmem:[#allocation4 + $0x10] sm:$0xff]
    %v121 = vld [vmem:[#allocation4 + $0x18] sm:$0xff]
    %v122 = vld [vmem:[#allocation4 + $0x20] sm:$0xff]
    %v123 = vld [vmem:[#allocation4 + $0x28] sm:$0xff]
    %v124 = vld [vmem:[#allocation4 + $0x30] sm:$0xff]
    %v125 = vld [vmem:[#allocation4 + $0x38] sm:$0xff]
    %v126 = vld [vmem:[#allocation4 + $0x40] sm:$0xff]
    %v127 = vld [vmem:[#allocation4 + $0x48] sm:$0xff]
    %v128 = vld [vmem:[#allocation4 + $0x50] sm:$0xff]
    %v129 = vld [vmem:[#allocation4 + $0x58] sm:$0xff]
    %v130 = vld [vmem:[#allocation4 + $0x60] sm:$0xff]
    %v131 = vld [vmem:[#allocation4 + $0x68] sm:$0xff]
    %v132 = vld [vmem:[#allocation4 + $0x70] sm:$0xff]
    %v133 = vld [vmem:[#allocation4 + $0x78] sm:$0xff]
    %v134 = vld [vmem:[#allocation4 + $0x80] sm:$0xff]
    %v135 = vld [vmem:[#allocation4 + $0x88] sm:$0xff]
    %v136 = vld [vmem:[#allocation4 + $0x90] sm:$0xff]
    %v137 = vld [vmem:[#allocation4 + $0x98] sm:$0xff]
    %v138 = vld [vmem:[#allocation4 + $0xa0] sm:$0xff]
    %v139 = vld [vmem:[#allocation4 + $0xa8] sm:$0xff]
    %v140 = vld [vmem:[#allocation4 + $0xb0] sm:$0xff]
    %v141 = vld [vmem:[#allocation4 + $0xb8] sm:$0xff]
    %v142 = vld [vmem:[#allocation4 + $0xc0] sm:$0xff]
    %v143 = vld [vmem:[#allocation4 + $0xc8] sm:$0xff]
    %v144 = vld [vmem:[#allocation4 + $0xd0] sm:$0xff]
    %v145 = vld [vmem:[#allocation4 + $0xd8] sm:$0xff]
    %v146 = vld [vmem:[#allocation4 + $0xe0] sm:$0xff]
    %v147 = vld [vmem:[#allocation4 + $0xe8] sm:$0xff]
    %v148 = vld [vmem:[#allocation4 + $0xf0] sm:$0xff]
    %v149 = vld [vmem:[#allocation4 + $0xf8] sm:$0xff]
    %v150 = vld [vmem:[#allocation4 + $0x100] sm:$0xff]
    %v151 = vld [vmem:[#allocation4 + $0x108] sm:$0xff]
    %v152 = vld [vmem:[#allocation4 + $0x110] sm:$0xff]
    %v153 = vld [vmem:[#allocation4 + $0x118] sm:$0xff]
    %v154 = vld [vmem:[#allocation4 + $0x120] sm:$0xff]
    %v155 = vld [vmem:[#allocation4 + $0x128] sm:$0xff]
    %v156 = vld [vmem:[#allocation4 + $0x130] sm:$0xff]
    %v157 = vld [vmem:[#allocation4 + $0x138] sm:$0xff]
    %v158 = vld [vmem:[#allocation4 + $0x140] sm:$0xff]
    %v159 = vld [vmem:[#allocation4 + $0x148] sm:$0xff]
    %v160 = vld [vmem:[#allocation4 + $0x150] sm:$0xff]
    %v161 = vld [vmem:[#allocation4 + $0x158] sm:$0xff]
    %v162 = vld [vmem:[#allocation4 + $0x160] sm:$0xff]
    %v163 = vld [vmem:[#allocation4 + $0x168] sm:$0xff]
    %v164 = vld [vmem:[#allocation4 + $0x170] sm:$0xff]
    %v165 = vld [vmem:[#allocation4 + $0x178] sm:$0xff]
    %v166 = vld [vmem:[#allocation4 + $0x180] sm:$0xff]
    %v167 = vld [vmem:[#allocation4 + $0x188] sm:$0xff]
    %v168 = vld [vmem:[#allocation4 + $0x190] sm:$0xff]
    %v169 = vld [vmem:[#allocation4 + $0x198] sm:$0xff]
    %v170 = vld [vmem:[#allocation4 + $0x1a0] sm:$0xff]
    %v171 = vld [vmem:[#allocation4 + $0x1a8] sm:$0xff]
    %v172 = vld [vmem:[#allocation4 + $0x1b0] sm:$0xff]
    %v173 = vld [vmem:[#allocation4 + $0x1b8] sm:$0xff]
    %v174 = vld [vmem:[#allocation4 + $0x1c0] sm:$0xff]
    %v175 = vld [vmem:[#allocation4 + $0x1c8] sm:$0xff]
    %v176 = vld [vmem:[#allocation4 + $0x1d0] sm:$0xff]
    %v177 = vld [vmem:[#allocation4 + $0x1d8] sm:$0xff]
    %v178 = vld [vmem:[#allocation4 + $0x1e0] sm:$0xff]
    %v179 = vld [vmem:[#allocation4 + $0x1e8] sm:$0xff]
    %v180 = vld [vmem:[#allocation4 + $0x1f0] sm:$0xff]
    %v181 = vld [vmem:[#allocation4 + $0x1f8] sm:$0xff]
    %v182 = vld [vmem:[#allocation4 + $0x200] sm:$0xff]
    %v183 = vld [vmem:[#allocation4 + $0x208] sm:$0xff]
    %v184 = vld [vmem:[#allocation4 + $0x210] sm:$0xff]
    %v185 = vld [vmem:[#allocation4 + $0x218] sm:$0xff]
    %v186 = vld [vmem:[#allocation4 + $0x220] sm:$0xff]
    %v187 = vld [vmem:[#allocation4 + $0x228] sm:$0xff]
    %v188 = vld [vmem:[#allocation4 + $0x230] sm:$0xff]
    %v189 = vld [vmem:[#allocation4 + $0x238] sm:$0xff]
    %v190 = vld [vmem:[#allocation4 + $0x240] sm:$0xff]
    %v191 = vld [vmem:[#allocation4 + $0x248] sm:$0xff]
    %v192 = vld [vmem:[#allocation4 + $0x250] sm:$0xff]
    %v193 = vld [vmem:[#allocation4 + $0x258] sm:$0xff]
    %v194 = vld [vmem:[#allocation4 + $0x260] sm:$0xff]
    %v195 = vld [vmem:[#allocation4 + $0x268] sm:$0xff]
    %v196 = vld [vmem:[#allocation4 + $0x270] sm:$0xff]
    %v197 = vld [vmem:[#allocation4 + $0x278] sm:$0xff]
    %v198 = vld [vmem:[#allocation4 + $0x280] sm:$0xff]
    %v199 = vld [vmem:[#allocation4 + $0x288] sm:$0xff]
    %v200 = vld [vmem:[#allocation4 + $0x290] sm:$0xff]
    %v201 = vld [vmem:[#allocation4 + $0x298] sm:$0xff]
    %v202 = vld [vmem:[#allocation4 + $0x2a0] sm:$0xff]
    %v203 = vld [vmem:[#allocation4 + $0x2a8] sm:$0xff]
    %v204 = vld [vmem:[#allocation4 + $0x2b0] sm:$0xff]
    %v205 = vld [vmem:[#allocation4 + $0x2b8] sm:$0xff]
    %v206 = vld [vmem:[#allocation4 + $0x2c0] sm:$0xff]
    %v207 = vld [vmem:[#allocation4 + $0x2c8] sm:$0xff]
    %v208 = vld [vmem:[#allocation4 + $0x2d0] sm:$0xff]
    %v209 = vld [vmem:[#allocation4 + $0x2d8] sm:$0xff]
    %v210 = vld [vmem:[#allocation4 + $0x2e0] sm:$0xff]
    %v211 = vld [vmem:[#allocation4 + $0x2e8] sm:$0xff]
    %v212 = vld [vmem:[#allocation4 + $0x2f0] sm:$0xff]
    %v213 = vld [vmem:[#allocation4 + $0x2f8] sm:$0xff]
    %v214 = vld [vmem:[#allocation4 + $0x300] sm:$0xff]
    %v215 = vld [vmem:[#allocation4 + $0x308] sm:$0xff]
    %v216 = vld [vmem:[#allocation4 + $0x310] sm:$0xff]
    %v217 = vld [vmem:[#allocation4 + $0x318] sm:$0xff]
    %v218 = vld [vmem:[#allocation4 + $0x320] sm:$0xff]
    %v219 = vld [vmem:[#allocation4 + $0x328] sm:$0xff]
    %v220 = vld [vmem:[#allocation4 + $0x330] sm:$0xff]
    %v221 = vld [vmem:[#allocation4 + $0x338] sm:$0xff]
    %v222 = vld [vmem:[#allocation4 + $0x340] sm:$0xff]
    %v223 = vld [vmem:[#allocation4 + $0x348] sm:$0xff]
    %v224 = vld [vmem:[#allocation4 + $0x350] sm:$0xff]
    %v225 = vld [vmem:[#allocation4 + $0x358] sm:$0xff]
    %v226 = vld [vmem:[#allocation4 + $0x360] sm:$0xff]
    %v227 = vld [vmem:[#allocation4 + $0x368] sm:$0xff]
    %v228 = vld [vmem:[#allocation4 + $0x370] sm:$0xff]
    %v229 = vld [vmem:[#allocation4 + $0x378] sm:$0xff]
    %v230 = vld [vmem:[#allocation4 + $0x380] sm:$0xff]
    %v231 = vld [vmem:[#allocation4 + $0x388] sm:$0xff]
    %v232 = vld [vmem:[#allocation4 + $0x390] sm:$0xff]
    %v233 = vld [vmem:[#allocation4 + $0x398] sm:$0xff]
    %v234 = vld [vmem:[#allocation4 + $0x3a0] sm:$0xff]
    %v235 = vld [vmem:[#allocation4 + $0x3a8] sm:$0xff]
    %v236 = vld [vmem:[#allocation4 + $0x3b0] sm:$0xff]
    %v237 = vld [vmem:[#allocation4 + $0x3b8] sm:$0xff]
    %v238 = vld [vmem:[#allocation4 + $0x3c0] sm:$0xff]
    %v239 = vld [vmem:[#allocation4 + $0x3c8] sm:$0xff]
    %v240 = vld [vmem:[#allocation4 + $0x3d0] sm:$0xff]
    %v241 = vld [vmem:[#allocation4 + $0x3d8] sm:$0xff]
    %v242 = vld [vmem:[#allocation4 + $0x3e0] sm:$0xff]
    %v243 = vld [vmem:[#allocation4 + $0x3e8] sm:$0xff]
    %v244 = vld [vmem:[#allocation4 + $0x3f0] sm:$0xff]
    %v245 = vld [vmem:[#allocation4 + $0x3f8] sm:$0xff]
    %v246 = vld [vmem:[#allocation4 + $0x400] sm:$0xff]
    %v247 = vld [vmem:[#allocation4 + $0x408] sm:$0xff]
    %v248 = vld [vmem:[#allocation4 + $0x410] sm:$0xff]
    %v249 = vld [vmem:[#allocation4 + $0x418] sm:$0xff]
    %v250 = vld [vmem:[#allocation4 + $0x420] sm:$0xff]
    %v251 = vld [vmem:[#allocation4 + $0x428] sm:$0xff]
    %v252 = vld [vmem:[#allocation4 + $0x430] sm:$0xff]
    %v253 = vld [vmem:[#allocation4 + $0x438] sm:$0xff]
    %v254 = vld [vmem:[#allocation4 + $0x440] sm:$0xff]
    %v255 = vld [vmem:[#allocation4 + $0x448] sm:$0xff]
    %v256 = vld [vmem:[#allocation4 + $0x450] sm:$0xff]
    %v257 = vld [vmem:[#allocation4 + $0x458] sm:$0xff]
    %v258 = vld [vmem:[#allocation4 + $0x460] sm:$0xff]
    %v259 = vld [vmem:[#allocation4 + $0x468] sm:$0xff]
    %v260 = vld [vmem:[#allocation4 + $0x470] sm:$0xff]
    %v261 = vld [vmem:[#allocation4 + $0x478] sm:$0xff]
    %v262 = vld [vmem:[#allocation4 + $0x480] sm:$0xff]
    %v263 = vld [vmem:[#allocation4 + $0x488] sm:$0xff]
    %v264 = vld [vmem:[#allocation4 + $0x490] sm:$0xff]
    %v265 = vld [vmem:[#allocation4 + $0x498] sm:$0xff]
    %v266 = vld [vmem:[#allocation4 + $0x4a0] sm:$0xff]
    %v267 = vld [vmem:[#allocation4 + $0x4a8] sm:$0xff]
    %v268 = vld [vmem:[#allocation4 + $0x4b0] sm:$0xff]
    %v269 = vld [vmem:[#allocation4 + $0x4b8] sm:$0xff]
    %v270 = vld [vmem:[#allocation4 + $0x4c0] sm:$0xff]
    %v271 = vld [vmem:[#allocation4 + $0x4c8] sm:$0xff]
    %v272 = vld [vmem:[#allocation4 + $0x4d0] sm:$0xff]
    %v273 = vld [vmem:[#allocation4 + $0x4d8] sm:$0xff]
    %v274 = vld [vmem:[#allocation4 + $0x4e0] sm:$0xff]
    %v275 = vld [vmem:[#allocation4 + $0x4e8] sm:$0xff]
    %v276 = vld [vmem:[#allocation4 + $0x4f0] sm:$0xff]
    %v277 = vld [vmem:[#allocation4 + $0x4f8] sm:$0xff]
    %v278 = vld [vmem:[#allocation4 + $0x500] sm:$0xff]
    %v279 = vld [vmem:[#allocation4 + $0x508] sm:$0xff]
    %v280 = vld [vmem:[#allocation4 + $0x510] sm:$0xff]
    %v281 = vld [vmem:[#allocation4 + $0x518] sm:$0xff]
    %v282 = vld [vmem:[#allocation4 + $0x520] sm:$0xff]
    %v283 = vld [vmem:[#allocation4 + $0x528] sm:$0xff]
    %v284 = vld [vmem:[#allocation4 + $0x530] sm:$0xff]
    %v285 = vld [vmem:[#allocation4 + $0x538] sm:$0xff]
    %v286 = vld [vmem:[#allocation4 + $0x540] sm:$0xff]
    %v287 = vld [vmem:[#allocation4 + $0x548] sm:$0xff]
    %v288 = vld [vmem:[#allocation4 + $0x550] sm:$0xff]
    %v289 = vld [vmem:[#allocation4 + $0x558] sm:$0xff]
    %v290 = vld [vmem:[#allocation4 + $0x560] sm:$0xff]
    %v291 = vld [vmem:[#allocation4 + $0x568] sm:$0xff]
    %v292 = vld [vmem:[#allocation4 + $0x570] sm:$0xff]
    %v293 = vld [vmem:[#allocation4 + $0x578] sm:$0xff]
    %v294 = vld [vmem:[#allocation4 + $0x580] sm:$0xff]
    %v295 = vld [vmem:[#allocation4 + $0x588] sm:$0xff]
    %v296 = vld [vmem:[#allocation4 + $0x590] sm:$0xff]
    %v297 = vld [vmem:[#allocation4 + $0x598] sm:$0xff]
    %v298 = vld [vmem:[#allocation4 + $0x5a0] sm:$0xff]
    %v299 = vld [vmem:[#allocation4 + $0x5a8] sm:$0xff]
    %v300 = vld [vmem:[#allocation4 + $0x5b0] sm:$0xff]
    %v301 = vld [vmem:[#allocation4 + $0x5b8] sm:$0xff]
    %v302 = vld [vmem:[#allocation4 + $0x5c0] sm:$0xff]
    %v303 = vld [vmem:[#allocation4 + $0x5c8] sm:$0xff]
    %v304 = vld [vmem:[#allocation4 + $0x5d0] sm:$0xff]
    %v305 = vld [vmem:[#allocation4 + $0x5d8] sm:$0xff]
    %v306 = vld [vmem:[#allocation4 + $0x5e0] sm:$0xff]
    %v307 = vld [vmem:[#allocation4 + $0x5e8] sm:$0xff]
    %v308 = vld [vmem:[#allocation4 + $0x5f0] sm:$0xff]
    %v309 = vld [vmem:[#allocation4 + $0x5f8] sm:$0xff]
    %v310 = vld [vmem:[#allocation4 + $0x600] sm:$0xff]
    %v311 = vld [vmem:[#allocation4 + $0x608] sm:$0xff]
    %v312 = vld [vmem:[#allocation4 + $0x610] sm:$0xff]
    %v313 = vld [vmem:[#allocation4 + $0x618] sm:$0xff]
    %v314 = vld [vmem:[#allocation4 + $0x620] sm:$0xff]
    %v315 = vld [vmem:[#allocation4 + $0x628] sm:$0xff]
    %v316 = vld [vmem:[#allocation4 + $0x630] sm:$0xff]
    %v317 = vld [vmem:[#allocation4 + $0x638] sm:$0xff]
    %v318 = vld [vmem:[#allocation4 + $0x640] sm:$0xff]
    %v319 = vld [vmem:[#allocation4 + $0x648] sm:$0xff]
    %v320 = vld [vmem:[#allocation4 + $0x650] sm:$0xff]
    %v321 = vld [vmem:[#allocation4 + $0x658] sm:$0xff]
    %v322 = vld [vmem:[#allocation4 + $0x660] sm:$0xff]
    %v323 = vld [vmem:[#allocation4 + $0x668] sm:$0xff]
    %v324 = vld [vmem:[#allocation4 + $0x670] sm:$0xff]
    %v325 = vld [vmem:[#allocation4 + $0x678] sm:$0xff]
    %v326 = vld [vmem:[#allocation4 + $0x680] sm:$0xff]
    %v327 = vld [vmem:[#allocation4 + $0x688] sm:$0xff]
    %v328 = vld [vmem:[#allocation4 + $0x690] sm:$0xff]
    %v329 = vld [vmem:[#allocation4 + $0x698] sm:$0xff]
    %v330 = vld [vmem:[#allocation4 + $0x6a0] sm:$0xff]
    %v331 = vld [vmem:[#allocation4 + $0x6a8] sm:$0xff]
    %v332 = vld [vmem:[#allocation4 + $0x6b0] sm:$0xff]
    %v333 = vld [vmem:[#allocation4 + $0x6b8] sm:$0xff]
    %v334 = vld [vmem:[#allocation4 + $0x6c0] sm:$0xff]
    %v335 = vld [vmem:[#allocation4 + $0x6c8] sm:$0xff]
    %v336 = vld [vmem:[#allocation4 + $0x6d0] sm:$0xff]
    %v337 = vld [vmem:[#allocation4 + $0x6d8] sm:$0xff]
    %v338 = vld [vmem:[#allocation4 + $0x6e0] sm:$0xff]
    %v339 = vld [vmem:[#allocation4 + $0x6e8] sm:$0xff]
    %v340 = vld [vmem:[#allocation4 + $0x6f0] sm:$0xff]
    %v341 = vld [vmem:[#allocation4 + $0x6f8] sm:$0xff]
    %v342 = vld [vmem:[#allocation4 + $0x700] sm:$0xff]
    %v343 = vld [vmem:[#allocation4 + $0x708] sm:$0xff]
    %v344 = vld [vmem:[#allocation4 + $0x710] sm:$0xff]
    %v345 = vld [vmem:[#allocation4 + $0x718] sm:$0xff]
    %v346 = vld [vmem:[#allocation4 + $0x720] sm:$0xff]
    %v347 = vld [vmem:[#allocation4 + $0x728] sm:$0xff]
    %v348 = vld [vmem:[#allocation4 + $0x730] sm:$0xff]
    %v349 = vld [vmem:[#allocation4 + $0x738] sm:$0xff]
    %v350 = vld [vmem:[#allocation4 + $0x740] sm:$0xff]
    %v351 = vld [vmem:[#allocation4 + $0x748] sm:$0xff]
    %v352 = vld [vmem:[#allocation4 + $0x750] sm:$0xff]
    %v353 = vld [vmem:[#allocation4 + $0x758] sm:$0xff]
    %v354 = vld [vmem:[#allocation4 + $0x760] sm:$0xff]
    %v355 = vld [vmem:[#allocation4 + $0x768] sm:$0xff]
    %v356 = vld [vmem:[#allocation4 + $0x770] sm:$0xff]
    %v357 = vld [vmem:[#allocation4 + $0x778] sm:$0xff]
    %v358 = vld [vmem:[#allocation4 + $0x780] sm:$0xff]
    %v359 = vld [vmem:[#allocation4 + $0x788] sm:$0xff]
    %v360 = vld [vmem:[#allocation4 + $0x790] sm:$0xff]
    %v361 = vld [vmem:[#allocation4 + $0x798] sm:$0xff]
    %v362 = vld [vmem:[#allocation4 + $0x7a0] sm:$0xff]
    %v363 = vld [vmem:[#allocation4 + $0x7a8] sm:$0xff]
    %v364 = vld [vmem:[#allocation4 + $0x7b0] sm:$0xff]
    %v365 = vld [vmem:[#allocation4 + $0x7b8] sm:$0xff]
    %v366 = vld [vmem:[#allocation4 + $0x7c0] sm:$0xff]
    %v367 = vld [vmem:[#allocation4 + $0x7c8] sm:$0xff]
    %v368 = vld [vmem:[#allocation4 + $0x7d0] sm:$0xff]
    %v369 = vld [vmem:[#allocation4 + $0x7d8] sm:$0xff]
    %v370 = vld [vmem:[#allocation4 + $0x7e0] sm:$0xff]
    %v371 = vld [vmem:[#allocation4 + $0x7e8] sm:$0xff]
    %v372 = vld [vmem:[#allocation4 + $0x7f0] sm:$0xff]
    %v373 = vld [vmem:[#allocation4 + $0x7f8] sm:$0xff]
    %v374 = vld [vmem:[#allocation4 + $0x800] sm:$0xff]
    %v375 = vld [vmem:[#allocation4 + $0x808] sm:$0xff]
    %v376 = vld [vmem:[#allocation4 + $0x810] sm:$0xff]
    %v377 = vld [vmem:[#allocation4 + $0x818] sm:$0xff]
    %v378 = vld [vmem:[#allocation4 + $0x820] sm:$0xff]
    %v379 = vld [vmem:[#allocation4 + $0x828] sm:$0xff]
    %v380 = vld [vmem:[#allocation4 + $0x830] sm:$0xff]
    %v381 = vld [vmem:[#allocation4 + $0x838] sm:$0xff]
    %v382 = vld [vmem:[#allocation4 + $0x840] sm:$0xff]
    %v383 = vld [vmem:[#allocation4 + $0x848] sm:$0xff]
    %v384 = vld [vmem:[#allocation4 + $0x850] sm:$0xff]
    %v385 = vld [vmem:[#allocation4 + $0x858] sm:$0xff]
    %v386 = vld [vmem:[#allocation4 + $0x860] sm:$0xff]
    %v387 = vld [vmem:[#allocation4 + $0x868] sm:$0xff]
    %v388 = vld [vmem:[#allocation4 + $0x870] sm:$0xff]
    %v389 = vld [vmem:[#allocation4 + $0x878] sm:$0xff]
    %v390 = vld [vmem:[#allocation4 + $0x880] sm:$0xff]
    %v391 = vld [vmem:[#allocation4 + $0x888] sm:$0xff]
    %v392 = vld [vmem:[#allocation4 + $0x890] sm:$0xff]
    %v393 = vld [vmem:[#allocation4 + $0x898] sm:$0xff]
    %v394 = vld [vmem:[#allocation4 + $0x8a0] sm:$0xff]
    %v395 = vld [vmem:[#allocation4 + $0x8a8] sm:$0xff]
    %v396 = vld [vmem:[#allocation4 + $0x8b0] sm:$0xff]
    %v397 = vld [vmem:[#allocation4 + $0x8b8] sm:$0xff]
    %v398 = vld [vmem:[#allocation4 + $0x8c0] sm:$0xff]
    %v399 = vld [vmem:[#allocation4 + $0x8c8] sm:$0xff]
    %v400 = vld [vmem:[#allocation4 + $0x8d0] sm:$0xff]
    %v401 = vld [vmem:[#allocation4 + $0x8d8] sm:$0xff]
    %v402 = vld [vmem:[#allocation4 + $0x8e0] sm:$0xff]
    %v403 = vld [vmem:[#allocation4 + $0x8e8] sm:$0xff]
    %v404 = vld [vmem:[#allocation4 + $0x8f0] sm:$0xff]
    %v405 = vld [vmem:[#allocation4 + $0x8f8] sm:$0xff]
    %v406 = vld [vmem:[#allocation4 + $0x900] sm:$0xff]
    %v407 = vld [vmem:[#allocation4 + $0x908] sm:$0xff]
    %v408 = vld [vmem:[#allocation4 + $0x910] sm:$0xff]
    %v409 = vld [vmem:[#allocation4 + $0x918] sm:$0xff]
    %v410 = vld [vmem:[#allocation4 + $0x920] sm:$0xff]
    %v411 = vld [vmem:[#allocation4 + $0x928] sm:$0xff]
    %v412 = vld [vmem:[#allocation4 + $0x930] sm:$0xff]
    %v413 = vld [vmem:[#allocation4 + $0x938] sm:$0xff]
    %v414 = vld [vmem:[#allocation4 + $0x940] sm:$0xff]
    %v415 = vld [vmem:[#allocation4 + $0x948] sm:$0xff]
    %v416 = vld [vmem:[#allocation4 + $0x950] sm:$0xff]
    %v417 = vld [vmem:[#allocation4 + $0x958] sm:$0xff]
    %v418 = vld [vmem:[#allocation4 + $0x960] sm:$0xff]
    %v419 = vld [vmem:[#allocation4 + $0x968] sm:$0xff]
    %v420 = vld [vmem:[#allocation4 + $0x970] sm:$0xff]
    %v421 = vld [vmem:[#allocation4 + $0x978] sm:$0xff]
    %v422 = vld [vmem:[#allocation4 + $0x980] sm:$0xff]
    %v423 = vld [vmem:[#allocation4 + $0x988] sm:$0xff]
    %v424 = vld [vmem:[#allocation4 + $0x990] sm:$0xff]
    %v425 = vld [vmem:[#allocation4 + $0x998] sm:$0xff]
    %v426 = vld [vmem:[#allocation4 + $0x9a0] sm:$0xff]
    %v427 = vld [vmem:[#allocation4 + $0x9a8] sm:$0xff]
    %v428 = vld [vmem:[#allocation4 + $0x9b0] sm:$0xff]
    %v429 = vld [vmem:[#allocation4 + $0x9b8] sm:$0xff]
    %v430 = vld [vmem:[#allocation4 + $0x9c0] sm:$0xff]
    %v431 = vld [vmem:[#allocation4 + $0x9c8] sm:$0xff]
    %v432 = vld [vmem:[#allocation4 + $0x9d0] sm:$0xff]
    %v433 = vld [vmem:[#allocation4 + $0x9d8] sm:$0xff]
    %v434 = vld [vmem:[#allocation4 + $0x9e0] sm:$0xff]
    %v435 = vld [vmem:[#allocation4 + $0x9e8] sm:$0xff]
    %v436 = vld [vmem:[#allocation4 + $0x9f0] sm:$0xff]
    %v437 = vld [vmem:[#allocation4 + $0x9f8] sm:$0xff]
    %v438 = vld [vmem:[#allocation4 + $0xa00] sm:$0xff]
    %v439 = vld [vmem:[#allocation4 + $0xa08] sm:$0xff]
    %v440 = vld [vmem:[#allocation4 + $0xa10] sm:$0xff]
    %v441 = vld [vmem:[#allocation4 + $0xa18] sm:$0xff]
    %v442 = vld [vmem:[#allocation4 + $0xa20] sm:$0xff]
    %v443 = vld [vmem:[#allocation4 + $0xa28] sm:$0xff]
    %v444 = vld [vmem:[#allocation4 + $0xa30] sm:$0xff]
    %v445 = vld [vmem:[#allocation4 + $0xa38] sm:$0xff]
    %v446 = vld [vmem:[#allocation4 + $0xa40] sm:$0xff]
    %v447 = vld [vmem:[#allocation4 + $0xa48] sm:$0xff]
    %v448 = vld [vmem:[#allocation4 + $0xa50] sm:$0xff]
    %v449 = vld [vmem:[#allocation4 + $0xa58] sm:$0xff]
    %v450 = vld [vmem:[#allocation4 + $0xa60] sm:$0xff]
    %v451 = vld [vmem:[#allocation4 + $0xa68] sm:$0xff]
    %v452 = vld [vmem:[#allocation4 + $0xa70] sm:$0xff]
    %v453 = vld [vmem:[#allocation4 + $0xa78] sm:$0xff]
    %v454 = vld [vmem:[#allocation4 + $0xa80] sm:$0xff]
    %v455 = vld [vmem:[#allocation4 + $0xa88] sm:$0xff]
    %v456 = vld [vmem:[#allocation4 + $0xa90] sm:$0xff]
    %v457 = vld [vmem:[#allocation4 + $0xa98] sm:$0xff]
    %v458 = vld [vmem:[#allocation4 + $0xaa0] sm:$0xff]
    %v459 = vld [vmem:[#allocation4 + $0xaa8] sm:$0xff]
    %v460 = vld [vmem:[#allocation4 + $0xab0] sm:$0xff]
    %v461 = vld [vmem:[#allocation4 + $0xab8] sm:$0xff]
    %v462 = vld [vmem:[#allocation4 + $0xac0] sm:$0xff]
    %v463 = vld [vmem:[#allocation4 + $0xac8] sm:$0xff]
    %v464 = vld [vmem:[#allocation4 + $0xad0] sm:$0xff]
    %v465 = vld [vmem:[#allocation4 + $0xad8] sm:$0xff]
    %v466 = vld [vmem:[#allocation4 + $0xae0] sm:$0xff]
    %v467 = vld [vmem:[#allocation4 + $0xae8] sm:$0xff]
    %v468 = vld [vmem:[#allocation4 + $0xaf0] sm:$0xff]
    %v469 = vld [vmem:[#allocation4 + $0xaf8] sm:$0xff]
    %v470 = vld [vmem:[#allocation4 + $0xb00] sm:$0xff]
    %v471 = vld [vmem:[#allocation4 + $0xb08] sm:$0xff]
    %v472 = vld [vmem:[#allocation4 + $0xb10] sm:$0xff]
    %v473 = vld [vmem:[#allocation4 + $0xb18] sm:$0xff]
    %v474 = vld [vmem:[#allocation4 + $0xb20] sm:$0xff]
    %v475 = vld [vmem:[#allocation4 + $0xb28] sm:$0xff]
    %v476 = vld [vmem:[#allocation4 + $0xb30] sm:$0xff]
    %v477 = vld [vmem:[#allocation4 + $0xb38] sm:$0xff]
    %v478 = vld [vmem:[#allocation4 + $0xb40] sm:$0xff]
    %v479 = vld [vmem:[#allocation4 + $0xb48] sm:$0xff]
    %v480 = vld [vmem:[#allocation4 + $0xb50] sm:$0xff]
    %v481 = vld [vmem:[#allocation4 + $0xb58] sm:$0xff]
    %v482 = vld [vmem:[#allocation4 + $0xb60] sm:$0xff]
    %v483 = vld [vmem:[#allocation4 + $0xb68] sm:$0xff]
    %v484 = vld [vmem:[#allocation4 + $0xb70] sm:$0xff]
    %v485 = vld [vmem:[#allocation4 + $0xb78] sm:$0xff]
    %v486 = vld [vmem:[#allocation4 + $0xb80] sm:$0xff]
    %v487 = vld [vmem:[#allocation4 + $0xb88] sm:$0xff]
    %v488 = vld [vmem:[#allocation4 + $0xb90] sm:$0xff]
    %v489 = vld [vmem:[#allocation4 + $0xb98] sm:$0xff]
    %v490 = vld [vmem:[#allocation4 + $0xba0] sm:$0xff]
    %v491 = vld [vmem:[#allocation4 + $0xba8] sm:$0xff]
    %v492 = vld [vmem:[#allocation4 + $0xbb0] sm:$0xff]
    %v493 = vld [vmem:[#allocation4 + $0xbb8] sm:$0xff]
    %v494 = vld [vmem:[#allocation4 + $0xbc0] sm:$0xff]
    %v495 = vld [vmem:[#allocation4 + $0xbc8] sm:$0xff]
    %v496 = vld [vmem:[#allocation4 + $0xbd0] sm:$0xff]
    %v497 = vld [vmem:[#allocation4 + $0xbd8] sm:$0xff]
    %v498 = vld [vmem:[#allocation4 + $0xbe0] sm:$0xff]
    %v499 = vld [vmem:[#allocation4 + $0xbe8] sm:$0xff]
    %v500 = vld [vmem:[#allocation4 + $0xbf0] sm:$0xff]
    %v501 = vld [vmem:[#allocation4 + $0xbf8] sm:$0xff]
    %502 = vmatpush.msra.mxu0 %v178
    %503 = vmatpush.msra.mxu0 %v174
    %504 = vmatpush.msra.mxu0 %v170
    %505 = vmatpush.msra.mxu0 %v166
    %506 = vmatpush.msra.mxu0 %v162
    %507 = vmatpush.msra.mxu0 %v158
    %508 = vmatpush.msra.mxu0 %v154
    %509 = vmatpush.msra.mxu0 %v150
    %510 = vmatpush.msra.mxu0 %v146
    %511 = vmatpush.msra.mxu0 %v142
    %512 = vmatpush.msra.mxu0 %v138
    %513 = vmatpush.msra.mxu0 %v134
    %514 = vmatpush.msra.mxu0 %v130
    %515 = vmatpush.msra.mxu0 %v126
    %516 = vmatpush.msra.mxu0 %v122
    %517 = vmatpush.msra.mxu0 %v118
    %518 = vmatmul.f32.gmra.mxu0 %v112
    %v519 = vpop.f32.mrf.mxu0
    %v520 = vadd.f32 0.0, %v519
    %521 = vdwg.mxu0
    %522 = vmatpush.msra.mxu0 %v242
    %523 = vmatpush.msra.mxu0 %v238
    %524 = vmatpush.msra.mxu0 %v234
    %525 = vmatpush.msra.mxu0 %v230
    %526 = vmatpush.msra.mxu0 %v226
    %527 = vmatpush.msra.mxu0 %v222
    %528 = vmatpush.msra.mxu0 %v218
    %529 = vmatpush.msra.mxu0 %v214
    %530 = vmatpush.msra.mxu0 %v210
    %531 = vmatpush.msra.mxu0 %v206
    %532 = vmatpush.msra.mxu0 %v202
    %533 = vmatpush.msra.mxu0 %v198
    %534 = vmatpush.msra.mxu0 %v194
    %535 = vmatpush.msra.mxu0 %v190
    %536 = vmatpush.msra.mxu0 %v186
    %537 = vmatpush.msra.mxu0 %v182
    %538 = vmatmul.f32.gmra.mxu0 %v113
    %v539 = vpop.f32.mrf.mxu0
    %v540 = vadd.f32 %v520, %v539
    %541 = vdwg.mxu0
    %542 = vmatpush.msra.mxu0 %v306
    %543 = vmatpush.msra.mxu0 %v302
    %544 = vmatpush.msra.mxu0 %v298
    %545 = vmatpush.msra.mxu0 %v294
    %546 = vmatpush.msra.mxu0 %v290
    %547 = vmatpush.msra.mxu0 %v286
    %548 = vmatpush.msra.mxu0 %v282
    %549 = vmatpush.msra.mxu0 %v278
    %550 = vmatpush.msra.mxu0 %v274
    %551 = vmatpush.msra.mxu0 %v270
    %552 = vmatpush.msra.mxu0 %v266
    %553 = vmatpush.msra.mxu0 %v262
    %554 = vmatpush.msra.mxu0 %v258
    %555 = vmatpush.msra.mxu0 %v254
    %556 = vmatpush.msra.mxu0 %v250
    %557 = vmatpush.msra.mxu0 %v246
    %558 = vmatmul.f32.gmra.mxu0 %v114
    %v559 = vpop.f32.mrf.mxu0
    %v560 = vadd.f32 %v540, %v559
    %561 = vdwg.mxu0
    %562 = vmatpush.msra.mxu0 %v370
    %563 = vmatpush.msra.mxu0 %v366
    %564 = vmatpush.msra.mxu0 %v362
    %565 = vmatpush.msra.mxu0 %v358
    %566 = vmatpush.msra.mxu0 %v354
    %567 = vmatpush.msra.mxu0 %v350
    %568 = vmatpush.msra.mxu0 %v346
    %569 = vmatpush.msra.mxu0 %v342
    %570 = vmatpush.msra.mxu0 %v338
    %571 = vmatpush.msra.mxu0 %v334
    %572 = vmatpush.msra.mxu0 %v330
    %573 = vmatpush.msra.mxu0 %v326
    %574 = vmatpush.msra.mxu0 %v322
    %575 = vmatpush.msra.mxu0 %v318
    %576 = vmatpush.msra.mxu0 %v314
    %577 = vmatpush.msra.mxu0 %v310
    %578 = vmatmul.f32.gmra.mxu0 %v115
    %v579 = vpop.f32.mrf.mxu0
    %v580 = vadd.f32 %v560, %v579
    %581 = vdwg.mxu0
    %582 = vmatpush.msra.mxu0 %v434
    %583 = vmatpush.msra.mxu0 %v430
    %584 = vmatpush.msra.mxu0 %v426
    %585 = vmatpush.msra.mxu0 %v422
    %586 = vmatpush.msra.mxu0 %v418
    %587 = vmatpush.msra.mxu0 %v414
    %588 = vmatpush.msra.mxu0 %v410
    %589 = vmatpush.msra.mxu0 %v406
    %590 = vmatpush.msra.mxu0 %v402
    %591 = vmatpush.msra.mxu0 %v398
    %592 = vmatpush.msra.mxu0 %v394
    %593 = vmatpush.msra.mxu0 %v390
    %594 = vmatpush.msra.mxu0 %v386
    %595 = vmatpush.msra.mxu0 %v382
    %596 = vmatpush.msra.mxu0 %v378
    %597 = vmatpush.msra.mxu0 %v374
    %598 = vmatmul.f32.gmra.mxu0 %v116
    %v599 = vpop.f32.mrf.mxu0
    %v600 = vadd.f32 %v580, %v599
    %601 = vdwg.mxu0
    %602 = vmatpush.msra.mxu0 %v498
    %603 = vmatpush.msra.mxu0 %v494
    %604 = vmatpush.msra.mxu0 %v490
    %605 = vmatpush.msra.mxu0 %v486
    %606 = vmatpush.msra.mxu0 %v482
    %607 = vmatpush.msra.mxu0 %v478
    %608 = vmatpush.msra.mxu0 %v474
    %609 = vmatpush.msra.mxu0 %v470
    %610 = vmatpush.msra.mxu0 %v466
    %611 = vmatpush.msra.mxu0 %v462
    %612 = vmatpush.msra.mxu0 %v458
    %613 = vmatpush.msra.mxu0 %v454
    %614 = vmatpush.msra.mxu0 %v450
    %615 = vmatpush.msra.mxu0 %v446
    %616 = vmatpush.msra.mxu0 %v442
    %617 = vmatpush.msra.mxu0 %v438
    %618 = vmatmul.f32.gmra.mxu0 %v117
    %v619 = vpop.f32.mrf.mxu0
    %v620 = vadd.f32 %v600, %v619
    %621 = vdwg.mxu0
    %622 = vmatpush.msra.mxu0 %v179
    %623 = vmatpush.msra.mxu0 %v175
    %624 = vmatpush.msra.mxu0 %v171
    %625 = vmatpush.msra.mxu0 %v167
    %626 = vmatpush.msra.mxu0 %v163
    %627 = vmatpush.msra.mxu0 %v159
    %628 = vmatpush.msra.mxu0 %v155
    %629 = vmatpush.msra.mxu0 %v151
    %630 = vmatpush.msra.mxu0 %v147
    %631 = vmatpush.msra.mxu0 %v143
    %632 = vmatpush.msra.mxu0 %v139
    %633 = vmatpush.msra.mxu0 %v135
    %634 = vmatpush.msra.mxu0 %v131
    %635 = vmatpush.msra.mxu0 %v127
    %636 = vmatpush.msra.mxu0 %v123
    %637 = vmatpush.msra.mxu0 %v119
    %638 = vmatmul.f32.gmra.mxu0 %v112
    %v639 = vpop.f32.mrf.mxu0
    %v640 = vadd.f32 0.0, %v639
    %641 = vdwg.mxu0
    %642 = vmatpush.msra.mxu0 %v243
    %643 = vmatpush.msra.mxu0 %v239
    %644 = vmatpush.msra.mxu0 %v235
    %645 = vmatpush.msra.mxu0 %v231
    %646 = vmatpush.msra.mxu0 %v227
    %647 = vmatpush.msra.mxu0 %v223
    %648 = vmatpush.msra.mxu0 %v219
    %649 = vmatpush.msra.mxu0 %v215
    %650 = vmatpush.msra.mxu0 %v211
    %651 = vmatpush.msra.mxu0 %v207
    %652 = vmatpush.msra.mxu0 %v203
    %653 = vmatpush.msra.mxu0 %v199
    %654 = vmatpush.msra.mxu0 %v195
    %655 = vmatpush.msra.mxu0 %v191
    %656 = vmatpush.msra.mxu0 %v187
    %657 = vmatpush.msra.mxu0 %v183
    %658 = vmatmul.f32.gmra.mxu0 %v113
    %v659 = vpop.f32.mrf.mxu0
    %v660 = vadd.f32 %v640, %v659
    %661 = vdwg.mxu0
    %662 = vmatpush.msra.mxu0 %v307
    %663 = vmatpush.msra.mxu0 %v303
    %664 = vmatpush.msra.mxu0 %v299
    %665 = vmatpush.msra.mxu0 %v295
    %666 = vmatpush.msra.mxu0 %v291
    %667 = vmatpush.msra.mxu0 %v287
    %668 = vmatpush.msra.mxu0 %v283
    %669 = vmatpush.msra.mxu0 %v279
    %670 = vmatpush.msra.mxu0 %v275
    %671 = vmatpush.msra.mxu0 %v271
    %672 = vmatpush.msra.mxu0 %v267
    %673 = vmatpush.msra.mxu0 %v263
    %674 = vmatpush.msra.mxu0 %v259
    %675 = vmatpush.msra.mxu0 %v255
    %676 = vmatpush.msra.mxu0 %v251
    %677 = vmatpush.msra.mxu0 %v247
    %678 = vmatmul.f32.gmra.mxu0 %v114
    %v679 = vpop.f32.mrf.mxu0
    %v680 = vadd.f32 %v660, %v679
    %681 = vdwg.mxu0
    %682 = vmatpush.msra.mxu0 %v371
    %683 = vmatpush.msra.mxu0 %v367
    %684 = vmatpush.msra.mxu0 %v363
    %685 = vmatpush.msra.mxu0 %v359
    %686 = vmatpush.msra.mxu0 %v355
    %687 = vmatpush.msra.mxu0 %v351
    %688 = vmatpush.msra.mxu0 %v347
    %689 = vmatpush.msra.mxu0 %v343
    %690 = vmatpush.msra.mxu0 %v339
    %691 = vmatpush.msra.mxu0 %v335
    %692 = vmatpush.msra.mxu0 %v331
    %693 = vmatpush.msra.mxu0 %v327
    %694 = vmatpush.msra.mxu0 %v323
    %695 = vmatpush.msra.mxu0 %v319
    %696 = vmatpush.msra.mxu0 %v315
    %697 = vmatpush.msra.mxu0 %v311
    %698 = vmatmul.f32.gmra.mxu0 %v115
    %v699 = vpop.f32.mrf.mxu0
    %v700 = vadd.f32 %v680, %v699
    %701 = vdwg.mxu0
    %702 = vmatpush.msra.mxu0 %v435
    %703 = vmatpush.msra.mxu0 %v431
    %704 = vmatpush.msra.mxu0 %v427
    %705 = vmatpush.msra.mxu0 %v423
    %706 = vmatpush.msra.mxu0 %v419
    %707 = vmatpush.msra.mxu0 %v415
    %708 = vmatpush.msra.mxu0 %v411
    %709 = vmatpush.msra.mxu0 %v407
    %710 = vmatpush.msra.mxu0 %v403
    %711 = vmatpush.msra.mxu0 %v399
    %712 = vmatpush.msra.mxu0 %v395
    %713 = vmatpush.msra.mxu0 %v391
    %714 = vmatpush.msra.mxu0 %v387
    %715 = vmatpush.msra.mxu0 %v383
    %716 = vmatpush.msra.mxu0 %v379
    %717 = vmatpush.msra.mxu0 %v375
    %718 = vmatmul.f32.gmra.mxu0 %v116
    %v719 = vpop.f32.mrf.mxu0
    %v720 = vadd.f32 %v700, %v719
    %721 = vdwg.mxu0
    %722 = vmatpush.msra.mxu0 %v499
    %723 = vmatpush.msra.mxu0 %v495
    %724 = vmatpush.msra.mxu0 %v491
    %725 = vmatpush.msra.mxu0 %v487
    %726 = vmatpush.msra.mxu0 %v483
    %727 = vmatpush.msra.mxu0 %v479
    %728 = vmatpush.msra.mxu0 %v475
    %729 = vmatpush.msra.mxu0 %v471
    %730 = vmatpush.msra.mxu0 %v467
    %731 = vmatpush.msra.mxu0 %v463
    %732 = vmatpush.msra.mxu0 %v459
    %733 = vmatpush.msra.mxu0 %v455
    %734 = vmatpush.msra.mxu0 %v451
    %735 = vmatpush.msra.mxu0 %v447
    %736 = vmatpush.msra.mxu0 %v443
    %737 = vmatpush.msra.mxu0 %v439
    %738 = vmatmul.f32.gmra.mxu0 %v117
    %v739 = vpop.f32.mrf.mxu0
    %v740 = vadd.f32 %v720, %v739
    %741 = vdwg.mxu0
    %742 = vmatpush.msra.mxu0 %v180
    %743 = vmatpush.msra.mxu0 %v176
    %744 = vmatpush.msra.mxu0 %v172
    %745 = vmatpush.msra.mxu0 %v168
    %746 = vmatpush.msra.mxu0 %v164
    %747 = vmatpush.msra.mxu0 %v160
    %748 = vmatpush.msra.mxu0 %v156
    %749 = vmatpush.msra.mxu0 %v152
    %750 = vmatpush.msra.mxu0 %v148
    %751 = vmatpush.msra.mxu0 %v144
    %752 = vmatpush.msra.mxu0 %v140
    %753 = vmatpush.msra.mxu0 %v136
    %754 = vmatpush.msra.mxu0 %v132
    %755 = vmatpush.msra.mxu0 %v128
    %756 = vmatpush.msra.mxu0 %v124
    %757 = vmatpush.msra.mxu0 %v120
    %758 = vmatmul.f32.gmra.mxu0 %v112
    %v759 = vpop.f32.mrf.mxu0
    %v760 = vadd.f32 0.0, %v759
    %761 = vdwg.mxu0
    %762 = vmatpush.msra.mxu0 %v244
    %763 = vmatpush.msra.mxu0 %v240
    %764 = vmatpush.msra.mxu0 %v236
    %765 = vmatpush.msra.mxu0 %v232
    %766 = vmatpush.msra.mxu0 %v228
    %767 = vmatpush.msra.mxu0 %v224
    %768 = vmatpush.msra.mxu0 %v220
    %769 = vmatpush.msra.mxu0 %v216
    %770 = vmatpush.msra.mxu0 %v212
    %771 = vmatpush.msra.mxu0 %v208
    %772 = vmatpush.msra.mxu0 %v204
    %773 = vmatpush.msra.mxu0 %v200
    %774 = vmatpush.msra.mxu0 %v196
    %775 = vmatpush.msra.mxu0 %v192
    %776 = vmatpush.msra.mxu0 %v188
    %777 = vmatpush.msra.mxu0 %v184
    %778 = vmatmul.f32.gmra.mxu0 %v113
    %v779 = vpop.f32.mrf.mxu0
    %v780 = vadd.f32 %v760, %v779
    %781 = vdwg.mxu0
    %782 = vmatpush.msra.mxu0 %v308
    %783 = vmatpush.msra.mxu0 %v304
    %784 = vmatpush.msra.mxu0 %v300
    %785 = vmatpush.msra.mxu0 %v296
    %786 = vmatpush.msra.mxu0 %v292
    %787 = vmatpush.msra.mxu0 %v288
    %788 = vmatpush.msra.mxu0 %v284
    %789 = vmatpush.msra.mxu0 %v280
    %790 = vmatpush.msra.mxu0 %v276
    %791 = vmatpush.msra.mxu0 %v272
    %792 = vmatpush.msra.mxu0 %v268
    %793 = vmatpush.msra.mxu0 %v264
    %794 = vmatpush.msra.mxu0 %v260
    %795 = vmatpush.msra.mxu0 %v256
    %796 = vmatpush.msra.mxu0 %v252
    %797 = vmatpush.msra.mxu0 %v248
    %798 = vmatmul.f32.gmra.mxu0 %v114
    %v799 = vpop.f32.mrf.mxu0
    %v800 = vadd.f32 %v780, %v799
    %801 = vdwg.mxu0
    %802 = vmatpush.msra.mxu0 %v372
    %803 = vmatpush.msra.mxu0 %v368
    %804 = vmatpush.msra.mxu0 %v364
    %805 = vmatpush.msra.mxu0 %v360
    %806 = vmatpush.msra.mxu0 %v356
    %807 = vmatpush.msra.mxu0 %v352
    %808 = vmatpush.msra.mxu0 %v348
    %809 = vmatpush.msra.mxu0 %v344
    %810 = vmatpush.msra.mxu0 %v340
    %811 = vmatpush.msra.mxu0 %v336
    %812 = vmatpush.msra.mxu0 %v332
    %813 = vmatpush.msra.mxu0 %v328
    %814 = vmatpush.msra.mxu0 %v324
    %815 = vmatpush.msra.mxu0 %v320
    %816 = vmatpush.msra.mxu0 %v316
    %817 = vmatpush.msra.mxu0 %v312
    %818 = vmatmul.f32.gmra.mxu0 %v115
    %v819 = vpop.f32.mrf.mxu0
    %v820 = vadd.f32 %v800, %v819
    %821 = vdwg.mxu0
    %822 = vmatpush.msra.mxu0 %v436
    %823 = vmatpush.msra.mxu0 %v432
    %824 = vmatpush.msra.mxu0 %v428
    %825 = vmatpush.msra.mxu0 %v424
    %826 = vmatpush.msra.mxu0 %v420
    %827 = vmatpush.msra.mxu0 %v416
    %828 = vmatpush.msra.mxu0 %v412
    %829 = vmatpush.msra.mxu0 %v408
    %830 = vmatpush.msra.mxu0 %v404
    %831 = vmatpush.msra.mxu0 %v400
    %832 = vmatpush.msra.mxu0 %v396
    %833 = vmatpush.msra.mxu0 %v392
    %834 = vmatpush.msra.mxu0 %v388
    %835 = vmatpush.msra.mxu0 %v384
    %836 = vmatpush.msra.mxu0 %v380
    %837 = vmatpush.msra.mxu0 %v376
    %838 = vmatmul.f32.gmra.mxu0 %v116
    %v839 = vpop.f32.mrf.mxu0
    %v840 = vadd.f32 %v820, %v839
    %841 = vdwg.mxu0
    %842 = vmatpush.msra.mxu0 %v500
    %843 = vmatpush.msra.mxu0 %v496
    %844 = vmatpush.msra.mxu0 %v492
    %845 = vmatpush.msra.mxu0 %v488
    %846 = vmatpush.msra.mxu0 %v484
    %847 = vmatpush.msra.mxu0 %v480
    %848 = vmatpush.msra.mxu0 %v476
    %849 = vmatpush.msra.mxu0 %v472
    %850 = vmatpush.msra.mxu0 %v468
    %851 = vmatpush.msra.mxu0 %v464
    %852 = vmatpush.msra.mxu0 %v460
    %853 = vmatpush.msra.mxu0 %v456
    %854 = vmatpush.msra.mxu0 %v452
    %855 = vmatpush.msra.mxu0 %v448
    %856 = vmatpush.msra.mxu0 %v444
    %857 = vmatpush.msra.mxu0 %v440
    %858 = vmatmul.f32.gmra.mxu0 %v117
    %v859 = vpop.f32.mrf.mxu0
    %v860 = vadd.f32 %v840, %v859
    %861 = vdwg.mxu0
    %862 = vmatpush.msra.mxu0 %v181
    %863 = vmatpush.msra.mxu0 %v177
    %864 = vmatpush.msra.mxu0 %v173
    %865 = vmatpush.msra.mxu0 %v169
    %866 = vmatpush.msra.mxu0 %v165
    %867 = vmatpush.msra.mxu0 %v161
    %868 = vmatpush.msra.mxu0 %v157
    %869 = vmatpush.msra.mxu0 %v153
    %870 = vmatpush.msra.mxu0 %v149
    %871 = vmatpush.msra.mxu0 %v145
    %872 = vmatpush.msra.mxu0 %v141
    %873 = vmatpush.msra.mxu0 %v137
    %874 = vmatpush.msra.mxu0 %v133
    %875 = vmatpush.msra.mxu0 %v129
    %876 = vmatpush.msra.mxu0 %v125
    %877 = vmatpush.msra.mxu0 %v121
    %878 = vmatmul.f32.gmra.mxu0 %v112
    %v879 = vpop.f32.mrf.mxu0
    %v880 = vadd.f32 0.0, %v879
    %881 = vdwg.mxu0
    %882 = vmatpush.msra.mxu0 %v245
    %883 = vmatpush.msra.mxu0 %v241
    %884 = vmatpush.msra.mxu0 %v237
    %885 = vmatpush.msra.mxu0 %v233
    %886 = vmatpush.msra.mxu0 %v229
    %887 = vmatpush.msra.mxu0 %v225
    %888 = vmatpush.msra.mxu0 %v221
    %889 = vmatpush.msra.mxu0 %v217
    %890 = vmatpush.msra.mxu0 %v213
    %891 = vmatpush.msra.mxu0 %v209
    %892 = vmatpush.msra.mxu0 %v205
    %893 = vmatpush.msra.mxu0 %v201
    %894 = vmatpush.msra.mxu0 %v197
    %895 = vmatpush.msra.mxu0 %v193
    %896 = vmatpush.msra.mxu0 %v189
    %897 = vmatpush.msra.mxu0 %v185
    %898 = vmatmul.f32.gmra.mxu0 %v113
    %v899 = vpop.f32.mrf.mxu0
    %v900 = vadd.f32 %v880, %v899
    %901 = vdwg.mxu0
    %902 = vmatpush.msra.mxu0 %v309
    %903 = vmatpush.msra.mxu0 %v305
    %904 = vmatpush.msra.mxu0 %v301
    %905 = vmatpush.msra.mxu0 %v297
    %906 = vmatpush.msra.mxu0 %v293
    %907 = vmatpush.msra.mxu0 %v289
    %908 = vmatpush.msra.mxu0 %v285
    %909 = vmatpush.msra.mxu0 %v281
    %910 = vmatpush.msra.mxu0 %v277
    %911 = vmatpush.msra.mxu0 %v273
    %912 = vmatpush.msra.mxu0 %v269
    %913 = vmatpush.msra.mxu0 %v265
    %914 = vmatpush.msra.mxu0 %v261
    %915 = vmatpush.msra.mxu0 %v257
    %916 = vmatpush.msra.mxu0 %v253
    %917 = vmatpush.msra.mxu0 %v249
    %918 = vmatmul.f32.gmra.mxu0 %v114
    %v919 = vpop.f32.mrf.mxu0
    %v920 = vadd.f32 %v900, %v919
    %921 = vdwg.mxu0
    %922 = vmatpush.msra.mxu0 %v373
    %923 = vmatpush.msra.mxu0 %v369
    %924 = vmatpush.msra.mxu0 %v365
    %925 = vmatpush.msra.mxu0 %v361
    %926 = vmatpush.msra.mxu0 %v357
    %927 = vmatpush.msra.mxu0 %v353
    %928 = vmatpush.msra.mxu0 %v349
    %929 = vmatpush.msra.mxu0 %v345
    %930 = vmatpush.msra.mxu0 %v341
    %931 = vmatpush.msra.mxu0 %v337
    %932 = vmatpush.msra.mxu0 %v333
    %933 = vmatpush.msra.mxu0 %v329
    %934 = vmatpush.msra.mxu0 %v325
    %935 = vmatpush.msra.mxu0 %v321
    %936 = vmatpush.msra.mxu0 %v317
    %937 = vmatpush.msra.mxu0 %v313
    %938 = vmatmul.f32.gmra.mxu0 %v115
    %v939 = vpop.f32.mrf.mxu0
    %v940 = vadd.f32 %v920, %v939
    %941 = vdwg.mxu0
    %942 = vmatpush.msra.mxu0 %v437
    %943 = vmatpush.msra.mxu0 %v433
    %944 = vmatpush.msra.mxu0 %v429
    %945 = vmatpush.msra.mxu0 %v425
    %946 = vmatpush.msra.mxu0 %v421
    %947 = vmatpush.msra.mxu0 %v417
    %948 = vmatpush.msra.mxu0 %v413
    %949 = vmatpush.msra.mxu0 %v409
    %950 = vmatpush.msra.mxu0 %v405
    %951 = vmatpush.msra.mxu0 %v401
    %952 = vmatpush.msra.mxu0 %v397
    %953 = vmatpush.msra.mxu0 %v393
    %954 = vmatpush.msra.mxu0 %v389
    %955 = vmatpush.msra.mxu0 %v385
    %956 = vmatpush.msra.mxu0 %v381
    %957 = vmatpush.msra.mxu0 %v377
    %958 = vmatmul.f32.gmra.mxu0 %v116
    %v959 = vpop.f32.mrf.mxu0
    %v960 = vadd.f32 %v940, %v959
    %961 = vdwg.mxu0
    %962 = vmatpush.msra.mxu0 %v501
    %963 = vmatpush.msra.mxu0 %v497
    %964 = vmatpush.msra.mxu0 %v493
    %965 = vmatpush.msra.mxu0 %v489
    %966 = vmatpush.msra.mxu0 %v485
    %967 = vmatpush.msra.mxu0 %v481
    %968 = vmatpush.msra.mxu0 %v477
    %969 = vmatpush.msra.mxu0 %v473
    %970 = vmatpush.msra.mxu0 %v469
    %971 = vmatpush.msra.mxu0 %v465
    %972 = vmatpush.msra.mxu0 %v461
    %973 = vmatpush.msra.mxu0 %v457
    %974 = vmatpush.msra.mxu0 %v453
    %975 = vmatpush.msra.mxu0 %v449
    %976 = vmatpush.msra.mxu0 %v445
    %977 = vmatpush.msra.mxu0 %v441
    %978 = vmatmul.f32.gmra.mxu0 %v117
    %v979 = vpop.f32.mrf.mxu0
    %v980 = vadd.f32 %v960, %v979
    %981 = vdwg.mxu0
    %v982 = vadd.f32 %v108, %v620
    %v983 = vadd.f32 %v109, %v740
    %v984 = vadd.f32 %v110, %v860
    %v985 = vadd.f32 %v111, %v980
    %986 = vst [vmem:[#allocation2] sm:$0xff] %v982
    %987 = vst [vmem:[#allocation2 + $0x8] sm:$0xff] %v983
    %988 = vst [vmem:[#allocation2 + $0x10] sm:$0xff] %v984
    %989 = vst [vmem:[#allocation2 + $0x18] sm:$0xff] %v985
    // Predicated region
    $region54: #{discriminator_forward.1} parent=1 // pred_check
      %p990 = pneg %p100
    $region55: #{discriminator_forward.1} parent=1 // pred_check_branch
      %992 = sbr.rel (%p990) target = $region57
    $region56: #{discriminator_forward.1} parent=1 // pred_region
      %v993 = vld [vmem:[#allocation2] sm:$0xff]
      %v994 = vld [vmem:[#allocation2 + $0x8] sm:$0xff]
      %v995 = vld [vmem:[#allocation2 + $0x10] sm:$0xff]
      %v996 = vld [vmem:[#allocation2 + $0x18] sm:$0xff]
      %v997 = vld [vmem:[#allocation6] sm:$0xf]
      %v999 = vperm.slane %v997, 0
      %v1000 = vperm.slane %v997, 1
      %v1001 = vperm.slane %v997, 2
      %v1002 = vperm.slane %v997, 3
      %v1007 = vadd.f32 %v993, %v999
      %v1008 = vadd.f32 %v994, %v1000
      %v1009 = vadd.f32 %v995, %v1001
      %v1010 = vadd.f32 %v996, %v1002
      %vm1011 = vcmp.gt.f32.partialorder %v1007, 0.0
      %vm1012 = vcmp.gt.f32.partialorder %v1008, 0.0
      %vm1013 = vcmp.gt.f32.partialorder %v1009, 0.0
      %vm1014 = vcmp.gt.f32.partialorder %v1010, 0.0
      %v1015 = vmul.f32 %v1007, 0.2
      %v1016 = vmul.f32 %v1008, 0.2
      %v1017 = vmul.f32 %v1009, 0.2
      %v1018 = vmul.f32 %v1010, 0.2
      %v1019 = vsel %vm1011, %v1007, %v1015
      %v1020 = vsel %vm1012, %v1008, %v1016
      %v1021 = vsel %vm1013, %v1009, %v1017
      %v1022 = vsel %vm1014, %v1010, %v1018
      %v1023 = vld [vmem:[#allocation8] sm:$0xff]
      %v1024 = vld [vmem:[#allocation8 + $0x8] sm:$0xff]
      %v1025 = vld [vmem:[#allocation8 + $0x10] sm:$0xff]
      %v1026 = vld [vmem:[#allocation8 + $0x18] sm:$0xff]
      %v1027 = vld [vmem:[#allocation8 + $0x20] sm:$0xff]
      %v1028 = vld [vmem:[#allocation8 + $0x28] sm:$0xff]
      %v1029 = vld [vmem:[#allocation8 + $0x30] sm:$0xff]
      %v1030 = vld [vmem:[#allocation8 + $0x38] sm:$0xff]
      %v1031 = vld [vmem:[#allocation8 + $0x40] sm:$0xff]
      %v1032 = vld [vmem:[#allocation8 + $0x48] sm:$0xff]
      %v1033 = vld [vmem:[#allocation8 + $0x50] sm:$0xff]
      %v1034 = vld [vmem:[#allocation8 + $0x58] sm:$0xff]
      %v1035 = vld [vmem:[#allocation8 + $0x60] sm:$0xff]
      %v1036 = vld [vmem:[#allocation8 + $0x68] sm:$0xff]
      %v1037 = vld [vmem:[#allocation8 + $0x70] sm:$0xff]
      %v1038 = vld [vmem:[#allocation8 + $0x78] sm:$0xff]
      %v1039 = vld [vmem:[#allocation8 + $0x80] sm:$0xff]
      %v1040 = vld [vmem:[#allocation8 + $0x88] sm:$0xff]
      %v1041 = vld [vmem:[#allocation8 + $0x90] sm:$0xff]
      %v1042 = vld [vmem:[#allocation8 + $0x98] sm:$0xff]
      %v1043 = vld [vmem:[#allocation8 + $0xa0] sm:$0xff]
      %v1044 = vld [vmem:[#allocation8 + $0xa8] sm:$0xff]
      %v1045 = vld [vmem:[#allocation8 + $0xb0] sm:$0xff]
      %v1046 = vld [vmem:[#allocation8 + $0xb8] sm:$0xff]
      %v1047 = vld [vmem:[#allocation8 + $0xc0] sm:$0xff]
      %v1048 = vld [vmem:[#allocation8 + $0xc8] sm:$0xff]
      %v1049 = vld [vmem:[#allocation8 + $0xd0] sm:$0xff]
      %v1050 = vld [vmem:[#allocation8 + $0xd8] sm:$0xff]
      %v1051 = vld [vmem:[#allocation8 + $0xe0] sm:$0xff]
      %v1052 = vld [vmem:[#allocation8 + $0xe8] sm:$0xff]
      %v1053 = vld [vmem:[#allocation8 + $0xf0] sm:$0xff]
      %v1054 = vld [vmem:[#allocation8 + $0xf8] sm:$0xff]
      %v1055 = vld [vmem:[#allocation8 + $0x100] sm:$0xff]
      %v1056 = vld [vmem:[#allocation8 + $0x108] sm:$0xff]
      %v1057 = vld [vmem:[#allocation8 + $0x110] sm:$0xff]
      %v1058 = vld [vmem:[#allocation8 + $0x118] sm:$0xff]
      %v1059 = vld [vmem:[#allocation8 + $0x120] sm:$0xff]
      %v1060 = vld [vmem:[#allocation8 + $0x128] sm:$0xff]
      %v1061 = vld [vmem:[#allocation8 + $0x130] sm:$0xff]
      %v1062 = vld [vmem:[#allocation8 + $0x138] sm:$0xff]
      %v1063 = vld [vmem:[#allocation8 + $0x140] sm:$0xff]
      %v1064 = vld [vmem:[#allocation8 + $0x148] sm:$0xff]
      %v1065 = vld [vmem:[#allocation8 + $0x150] sm:$0xff]
      %v1066 = vld [vmem:[#allocation8 + $0x158] sm:$0xff]
      %v1067 = vld [vmem:[#allocation8 + $0x160] sm:$0xff]
      %v1068 = vld [vmem:[#allocation8 + $0x168] sm:$0xff]
      %v1069 = vld [vmem:[#allocation8 + $0x170] sm:$0xff]
      %v1070 = vld [vmem:[#allocation8 + $0x178] sm:$0xff]
      %v1071 = vld [vmem:[#allocation8 + $0x180] sm:$0xff]
      %v1072 = vld [vmem:[#allocation8 + $0x188] sm:$0xff]
      %v1073 = vld [vmem:[#allocation8 + $0x190] sm:$0xff]
      %v1074 = vld [vmem:[#allocation8 + $0x198] sm:$0xff]
      %v1075 = vld [vmem:[#allocation8 + $0x1a0] sm:$0xff]
      %v1076 = vld [vmem:[#allocation8 + $0x1a8] sm:$0xff]
      %v1077 = vld [vmem:[#allocation8 + $0x1b0] sm:$0xff]
      %v1078 = vld [vmem:[#allocation8 + $0x1b8] sm:$0xff]
      %v1079 = vld [vmem:[#allocation8 + $0x1c0] sm:$0xff]
      %v1080 = vld [vmem:[#allocation8 + $0x1c8] sm:$0xff]
      %v1081 = vld [vmem:[#allocation8 + $0x1d0] sm:$0xff]
      %v1082 = vld [vmem:[#allocation8 + $0x1d8] sm:$0xff]
      %v1083 = vld [vmem:[#allocation8 + $0x1e0] sm:$0xff]
      %v1084 = vld [vmem:[#allocation8 + $0x1e8] sm:$0xff]
      %v1085 = vld [vmem:[#allocation8 + $0x1f0] sm:$0xff]
      %v1086 = vld [vmem:[#allocation8 + $0x1f8] sm:$0xff]
      %v1087 = vld [vmem:[#allocation8 + $0x200] sm:$0xff]
      %v1088 = vld [vmem:[#allocation8 + $0x208] sm:$0xff]
      %v1089 = vld [vmem:[#allocation8 + $0x210] sm:$0xff]
      %v1090 = vld [vmem:[#allocation8 + $0x218] sm:$0xff]
      %v1091 = vld [vmem:[#allocation8 + $0x220] sm:$0xff]
      %v1092 = vld [vmem:[#allocation8 + $0x228] sm:$0xff]
      %v1093 = vld [vmem:[#allocation8 + $0x230] sm:$0xff]
      %v1094 = vld [vmem:[#allocation8 + $0x238] sm:$0xff]
      %v1095 = vld [vmem:[#allocation8 + $0x240] sm:$0xff]
      %v1096 = vld [vmem:[#allocation8 + $0x248] sm:$0xff]
      %v1097 = vld [vmem:[#allocation8 + $0x250] sm:$0xff]
      %v1098 = vld [vmem:[#allocation8 + $0x258] sm:$0xff]
      %v1099 = vld [vmem:[#allocation8 + $0x260] sm:$0xff]
      %v1100 = vld [vmem:[#allocation8 + $0x268] sm:$0xff]
      %v1101 = vld [vmem:[#allocation8 + $0x270] sm:$0xff]
      %v1102 = vld [vmem:[#allocation8 + $0x278] sm:$0xff]
      %v1103 = vld [vmem:[#allocation8 + $0x280] sm:$0xff]
      %v1104 = vld [vmem:[#allocation8 + $0x288] sm:$0xff]
      %v1105 = vld [vmem:[#allocation8 + $0x290] sm:$0xff]
      %v1106 = vld [vmem:[#allocation8 + $0x298] sm:$0xff]
      %v1107 = vld [vmem:[#allocation8 + $0x2a0] sm:$0xff]
      %v1108 = vld [vmem:[#allocation8 + $0x2a8] sm:$0xff]
      %v1109 = vld [vmem:[#allocation8 + $0x2b0] sm:$0xff]
      %v1110 = vld [vmem:[#allocation8 + $0x2b8] sm:$0xff]
      %v1111 = vld [vmem:[#allocation8 + $0x2c0] sm:$0xff]
      %v1112 = vld [vmem:[#allocation8 + $0x2c8] sm:$0xff]
      %v1113 = vld [vmem:[#allocation8 + $0x2d0] sm:$0xff]
      %v1114 = vld [vmem:[#allocation8 + $0x2d8] sm:$0xff]
      %v1115 = vld [vmem:[#allocation8 + $0x2e0] sm:$0xff]
      %v1116 = vld [vmem:[#allocation8 + $0x2e8] sm:$0xff]
      %v1117 = vld [vmem:[#allocation8 + $0x2f0] sm:$0xff]
      %v1118 = vld [vmem:[#allocation8 + $0x2f8] sm:$0xff]
      %v1119 = vld [vmem:[#allocation8 + $0x300] sm:$0xff]
      %v1120 = vld [vmem:[#allocation8 + $0x308] sm:$0xff]
      %v1121 = vld [vmem:[#allocation8 + $0x310] sm:$0xff]
      %v1122 = vld [vmem:[#allocation8 + $0x318] sm:$0xff]
      %v1123 = vld [vmem:[#allocation8 + $0x320] sm:$0xff]
      %v1124 = vld [vmem:[#allocation8 + $0x328] sm:$0xff]
      %v1125 = vld [vmem:[#allocation8 + $0x330] sm:$0xff]
      %v1126 = vld [vmem:[#allocation8 + $0x338] sm:$0xff]
      %v1127 = vld [vmem:[#allocation8 + $0x340] sm:$0xff]
      %v1128 = vld [vmem:[#allocation8 + $0x348] sm:$0xff]
      %v1129 = vld [vmem:[#allocation8 + $0x350] sm:$0xff]
      %v1130 = vld [vmem:[#allocation8 + $0x358] sm:$0xff]
      %v1131 = vld [vmem:[#allocation8 + $0x360] sm:$0xff]
      %v1132 = vld [vmem:[#allocation8 + $0x368] sm:$0xff]
      %v1133 = vld [vmem:[#allocation8 + $0x370] sm:$0xff]
      %v1134 = vld [vmem:[#allocation8 + $0x378] sm:$0xff]
      %v1135 = vld [vmem:[#allocation8 + $0x380] sm:$0xff]
      %v1136 = vld [vmem:[#allocation8 + $0x388] sm:$0xff]
      %v1137 = vld [vmem:[#allocation8 + $0x390] sm:$0xff]
      %v1138 = vld [vmem:[#allocation8 + $0x398] sm:$0xff]
      %v1139 = vld [vmem:[#allocation8 + $0x3a0] sm:$0xff]
      %v1140 = vld [vmem:[#allocation8 + $0x3a8] sm:$0xff]
      %v1141 = vld [vmem:[#allocation8 + $0x3b0] sm:$0xff]
      %v1142 = vld [vmem:[#allocation8 + $0x3b8] sm:$0xff]
      %v1143 = vld [vmem:[#allocation8 + $0x3c0] sm:$0xff]
      %v1144 = vld [vmem:[#allocation8 + $0x3c8] sm:$0xff]
      %v1145 = vld [vmem:[#allocation8 + $0x3d0] sm:$0xff]
      %v1146 = vld [vmem:[#allocation8 + $0x3d8] sm:$0xff]
      %v1147 = vld [vmem:[#allocation8 + $0x3e0] sm:$0xff]
      %v1148 = vld [vmem:[#allocation8 + $0x3e8] sm:$0xff]
      %v1149 = vld [vmem:[#allocation8 + $0x3f0] sm:$0xff]
      %v1150 = vld [vmem:[#allocation8 + $0x3f8] sm:$0xff]
      %v1151 = vld [vmem:[#allocation9] sm:$0x3]
      %v1153 = vperm.slane %v1151, 0
      %v1154 = vperm.slane %v1151, 1
      %1157 = vmatpush.msra.mxu0 %v1053
      %1158 = vmatpush.msra.mxu0 %v1051
      %1159 = vmatpush.msra.mxu0 %v1049
      %1160 = vmatpush.msra.mxu0 %v1047
      %1161 = vmatpush.msra.mxu0 %v1045
      %1162 = vmatpush.msra.mxu0 %v1043
      %1163 = vmatpush.msra.mxu0 %v1041
      %1164 = vmatpush.msra.mxu0 %v1039
      %1165 = vmatpush.msra.mxu0 %v1037
      %1166 = vmatpush.msra.mxu0 %v1035
      %1167 = vmatpush.msra.mxu0 %v1033
      %1168 = vmatpush.msra.mxu0 %v1031
      %1169 = vmatpush.msra.mxu0 %v1029
      %1170 = vmatpush.msra.mxu0 %v1027
      %1171 = vmatpush.msra.mxu0 %v1025
      %1172 = vmatpush.msra.mxu0 %v1023
      %1173 = vmatmul.f32.gmra.mxu0 %v1019
      %v1174 = vpop.f32.mrf.mxu0
      %v1175 = vadd.f32 %v1153, %v1174
      %1176 = vdwg.mxu0
      %1177 = vmatpush.msra.mxu0 %v1085
      %1178 = vmatpush.msra.mxu0 %v1083
      %1179 = vmatpush.msra.mxu0 %v1081
      %1180 = vmatpush.msra.mxu0 %v1079
      %1181 = vmatpush.msra.mxu0 %v1077
      %1182 = vmatpush.msra.mxu0 %v1075
      %1183 = vmatpush.msra.mxu0 %v1073
      %1184 = vmatpush.msra.mxu0 %v1071
      %1185 = vmatpush.msra.mxu0 %v1069
      %1186 = vmatpush.msra.mxu0 %v1067
      %1187 = vmatpush.msra.mxu0 %v1065
      %1188 = vmatpush.msra.mxu0 %v1063
      %1189 = vmatpush.msra.mxu0 %v1061
      %1190 = vmatpush.msra.mxu0 %v1059
      %1191 = vmatpush.msra.mxu0 %v1057
      %1192 = vmatpush.msra.mxu0 %v1055
      %1193 = vmatmul.f32.gmra.mxu0 %v1020
      %v1194 = vpop.f32.mrf.mxu0
      %v1195 = vadd.f32 %v1175, %v1194
      %1196 = vdwg.mxu0
      %1197 = vmatpush.msra.mxu0 %v1117
      %1198 = vmatpush.msra.mxu0 %v1115
      %1199 = vmatpush.msra.mxu0 %v1113
      %1200 = vmatpush.msra.mxu0 %v1111
      %1201 = vmatpush.msra.mxu0 %v1109
      %1202 = vmatpush.msra.mxu0 %v1107
      %1203 = vmatpush.msra.mxu0 %v1105
      %1204 = vmatpush.msra.mxu0 %v1103
      %1205 = vmatpush.msra.mxu0 %v1101
      %1206 = vmatpush.msra.mxu0 %v1099
      %1207 = vmatpush.msra.mxu0 %v1097
      %1208 = vmatpush.msra.mxu0 %v1095
      %1209 = vmatpush.msra.mxu0 %v1093
      %1210 = vmatpush.msra.mxu0 %v1091
      %1211 = vmatpush.msra.mxu0 %v1089
      %1212 = vmatpush.msra.mxu0 %v1087
      %1213 = vmatmul.f32.gmra.mxu0 %v1021
      %v1214 = vpop.f32.mrf.mxu0
      %v1215 = vadd.f32 %v1195, %v1214
      %1216 = vdwg.mxu0
      %1217 = vmatpush.msra.mxu0 %v1149
      %1218 = vmatpush.msra.mxu0 %v1147
      %1219 = vmatpush.msra.mxu0 %v1145
      %1220 = vmatpush.msra.mxu0 %v1143
      %1221 = vmatpush.msra.mxu0 %v1141
      %1222 = vmatpush.msra.mxu0 %v1139
      %1223 = vmatpush.msra.mxu0 %v1137
      %1224 = vmatpush.msra.mxu0 %v1135
      %1225 = vmatpush.msra.mxu0 %v1133
      %1226 = vmatpush.msra.mxu0 %v1131
      %1227 = vmatpush.msra.mxu0 %v1129
      %1228 = vmatpush.msra.mxu0 %v1127
      %1229 = vmatpush.msra.mxu0 %v1125
      %1230 = vmatpush.msra.mxu0 %v1123
      %1231 = vmatpush.msra.mxu0 %v1121
      %1232 = vmatpush.msra.mxu0 %v1119
      %1233 = vmatmul.f32.gmra.mxu0 %v1022
      %v1234 = vpop.f32.mrf.mxu0
      %v1235 = vadd.f32 %v1215, %v1234
      %1236 = vdwg.mxu0
      %1237 = vmatpush.msra.mxu0 %v1054
      %1238 = vmatpush.msra.mxu0 %v1052
      %1239 = vmatpush.msra.mxu0 %v1050
      %1240 = vmatpush.msra.mxu0 %v1048
      %1241 = vmatpush.msra.mxu0 %v1046
      %1242 = vmatpush.msra.mxu0 %v1044
      %1243 = vmatpush.msra.mxu0 %v1042
      %1244 = vmatpush.msra.mxu0 %v1040
      %1245 = vmatpush.msra.mxu0 %v1038
      %1246 = vmatpush.msra.mxu0 %v1036
      %1247 = vmatpush.msra.mxu0 %v1034
      %1248 = vmatpush.msra.mxu0 %v1032
      %1249 = vmatpush.msra.mxu0 %v1030
      %1250 = vmatpush.msra.mxu0 %v1028
      %1251 = vmatpush.msra.mxu0 %v1026
      %1252 = vmatpush.msra.mxu0 %v1024
      %1253 = vmatmul.f32.gmra.mxu0 %v1019
      %v1254 = vpop.f32.mrf.mxu0
      %v1255 = vadd.f32 %v1154, %v1254
      %1256 = vdwg.mxu0
      %1257 = vmatpush.msra.mxu0 %v1086
      %1258 = vmatpush.msra.mxu0 %v1084
      %1259 = vmatpush.msra.mxu0 %v1082
      %1260 = vmatpush.msra.mxu0 %v1080
      %1261 = vmatpush.msra.mxu0 %v1078
      %1262 = vmatpush.msra.mxu0 %v1076
      %1263 = vmatpush.msra.mxu0 %v1074
      %1264 = vmatpush.msra.mxu0 %v1072
      %1265 = vmatpush.msra.mxu0 %v1070
      %1266 = vmatpush.msra.mxu0 %v1068
      %1267 = vmatpush.msra.mxu0 %v1066
      %1268 = vmatpush.msra.mxu0 %v1064
      %1269 = vmatpush.msra.mxu0 %v1062
      %1270 = vmatpush.msra.mxu0 %v1060
      %1271 = vmatpush.msra.mxu0 %v1058
      %1272 = vmatpush.msra.mxu0 %v1056
      %1273 = vmatmul.f32.gmra.mxu0 %v1020
      %v1274 = vpop.f32.mrf.mxu0
      %v1275 = vadd.f32 %v1255, %v1274
      %1276 = vdwg.mxu0
      %1277 = vmatpush.msra.mxu0 %v1118
      %1278 = vmatpush.msra.mxu0 %v1116
      %1279 = vmatpush.msra.mxu0 %v1114
      %1280 = vmatpush.msra.mxu0 %v1112
      %1281 = vmatpush.msra.mxu0 %v1110
      %1282 = vmatpush.msra.mxu0 %v1108
      %1283 = vmatpush.msra.mxu0 %v1106
      %1284 = vmatpush.msra.mxu0 %v1104
      %1285 = vmatpush.msra.mxu0 %v1102
      %1286 = vmatpush.msra.mxu0 %v1100
      %1287 = vmatpush.msra.mxu0 %v1098
      %1288 = vmatpush.msra.mxu0 %v1096
      %1289 = vmatpush.msra.mxu0 %v1094
      %1290 = vmatpush.msra.mxu0 %v1092
      %1291 = vmatpush.msra.mxu0 %v1090
      %1292 = vmatpush.msra.mxu0 %v1088
      %1293 = vmatmul.f32.gmra.mxu0 %v1021
      %v1294 = vpop.f32.mrf.mxu0
      %v1295 = vadd.f32 %v1275, %v1294
      %1296 = vdwg.mxu0
      %1297 = vmatpush.msra.mxu0 %v1150
      %1298 = vmatpush.msra.mxu0 %v1148
      %1299 = vmatpush.msra.mxu0 %v1146
      %1300 = vmatpush.msra.mxu0 %v1144
      %1301 = vmatpush.msra.mxu0 %v1142
      %1302 = vmatpush.msra.mxu0 %v1140
      %1303 = vmatpush.msra.mxu0 %v1138
      %1304 = vmatpush.msra.mxu0 %v1136
      %1305 = vmatpush.msra.mxu0 %v1134
      %1306 = vmatpush.msra.mxu0 %v1132
      %1307 = vmatpush.msra.mxu0 %v1130
      %1308 = vmatpush.msra.mxu0 %v1128
      %1309 = vmatpush.msra.mxu0 %v1126
      %1310 = vmatpush.msra.mxu0 %v1124
      %1311 = vmatpush.msra.mxu0 %v1122
      %1312 = vmatpush.msra.mxu0 %v1120
      %1313 = vmatmul.f32.gmra.mxu0 %v1022
      %v1314 = vpop.f32.mrf.mxu0
      %v1315 = vadd.f32 %v1295, %v1314
      %1316 = vdwg.mxu0
      %vm1317 = vcmp.gt.f32.partialorder %v1235, 0.0
      %vm1318 = vcmp.gt.f32.partialorder %v1315, 0.0
      %v1319 = vmul.f32 %v1235, 0.2
      %v1320 = vmul.f32 %v1315, 0.2
      %v1321 = vsel %vm1317, %v1235, %v1319
      %v1322 = vsel %vm1318, %v1315, %v1320
      %v1323 = vld [vmem:[#allocation11] sm:$0x3]
      %v1325 = vperm.slane %v1323, 0
      %v1326 = vperm.slane %v1323, 1
      %v1329 = vmul.f32 %v1321, %v1325
      %v1330 = vmul.f32 %v1322, %v1326
      %v1331 = vadd.f32 %v1329, %v1330
      %1332 = vadd.xlane.f32.xlu0 %v1331
      %v1333 = vpop.xlane.xlu0 %1332
      %v1334 = vld [vmem:[#allocation3] sm:$0x1]
      %v1336 = vperm.slane %v1334, 0
      %v1338 = vadd.f32 %v1333, %v1336
      %1340 = vset.pattern.permute.xlu0 0
      %1341 = vperm.xlu0 %1340, %v1338
      %v1342 = vpop.permute.xlu0 %1341
      %1344 = vst [vmem:[%s7] sm:$0xff] %v1342
    $region57: #{discriminator_forward.1} parent=1 // pred_fallthru
      _
    // Predicated region
    $region58: #{discriminator_forward.1} parent=1 // pred_check
      _
    $region59: #{discriminator_forward.1} parent=1 // pred_check_branch
      %1346 = sbr.rel (0) target = $region61
    $region60: #{discriminator_forward.1} parent=1 // pred_region
      _
    $region61: #{discriminator_forward.1} parent=1 // pred_fallthru
      _
    // Predicated region
    $region62: #{discriminator_forward.1} parent=1 // pred_check
      _
    $region63: #{discriminator_forward.1} parent=1 // pred_check_branch
      %1348 = sbr.rel (0) target = $region65
    $region64: #{discriminator_forward.1} parent=1 // pred_region
      _
    $region65: #{discriminator_forward.1} parent=1 // pred_fallthru
      _
    %1349 = vsyncpa [#allocation5], 1
    %1350 = vsyncpa [#allocation7], 1
    %1351 = vsyncpa [#allocation10], 1

</llo_original>
